<compile_context>
chip_gen: v7x
topology: tpu7x:2x2x1
jax: 0.10.0
libtpu: 0.0.40
codegen_flags: <defaults>
</compile_context>

<pallas_src>
import functools

import jax
import jax.numpy as jnp
from jax.experimental import pallas as pl
from jax.experimental.pallas import tpu as pltpu

KERNEL_SIZE = 3
CONV_PAD = 2
NUM_PIECES = 3
LANE = 128
SUBLANE = 8


def _round_up(x, m):
    return (x + m - 1) // m * m


# ---------------------------------------------------------------------------
# Fused Pallas kernel (one batch tile per grid step)
# ---------------------------------------------------------------------------
def fused_relation_kernel(x1_ref, x2_ref, x3_ref, wf_ref, cb_ref, lw_ref,
                          lb_ref, o_ref, *, l_out_real):
    """Fused PiecewiseCNN (3 pieces) + Linear.

    x{i}_ref : (TB, L_buf_i, C_pad)  bf16  piece, conv/lane/sublane padded host-side
    wf_ref   : (3, C_pad, H_pad)     bf16  conv weight, wf[k, c, h]
    cb_ref   : (1, H_pad)            f32   conv bias
    lw_ref   : (3, H_pad, OUT_PAD)   bf16  linear weight, per-piece row blocks
    lb_ref   : (1, OUT_PAD)          f32   linear bias
    o_ref    : (TB, OUT_PAD)         f32
    l_out_real : tuple of 3 python ints = true conv output lengths (L_i + 2)
    """
    cb = cb_ref[...]

    def piece(x_ref, n_valid):
        tb, l_buf, c = x_ref.shape
        l_out = l_buf - (KERNEL_SIZE - 1)          # multiple of 8 (sublane aligned)
        x = x_ref[...]
        # Per-tap accumulating MXU dots (no im2col lane concat / relayout temp).
        acc = None
        for k in range(KERNEL_SIZE):
            lhs = x[:, k:k + l_out, :].reshape(tb * l_out, c)
            part = jnp.dot(lhs, wf_ref[k], preferred_element_type=jnp.float32)
            acc = part if acc is None else acc + part
        y = acc.reshape(tb, l_out, -1)             # (TB, l_out, H_pad) f32
        # Mask sublane-alignment rows to -inf before the length max.
        row = jax.lax.broadcasted_iota(jnp.int32, y.shape, 1)
        y = jnp.where(row < n_valid, y, -jnp.inf)
        m = jnp.max(y, axis=1)                     # (TB, H_pad)
        # Per-channel bias commutes with the length max: max(y + b) == max(y) + b.
        return jnp.tanh(m + cb)

    h1 = piece(x1_ref, l_out_real[0])
    h2 = piece(x2_ref, l_out_real[1])
    h3 = piece(x3_ref, l_out_real[2])

    # Three accumulating dots against per-piece weight blocks instead of a
    # 3*hidden lane concat (and no host-side interleave permutation needed).
    out = jnp.dot(h1.astype(jnp.bfloat16), lw_ref[0],
                  preferred_element_type=jnp.float32)
    out = out + jnp.dot(h2.astype(jnp.bfloat16), lw_ref[1],
                        preferred_element_type=jnp.float32)
    out = out + jnp.dot(h3.astype(jnp.bfloat16), lw_ref[2],
                        preferred_element_type=jnp.float32)
    o_ref[...] = out + lb_ref[...]


# ---------------------------------------------------------------------------
# Host-side layout plumbing (padding / dtype / per-piece weight blocks)
# ---------------------------------------------------------------------------
def _prep_piece(x, c_pad, batch_pad):
    """Bake conv padding (=2), sublane alignment of l_out, lane padding and the
    batch-tile padding into a single bf16 HBM array.  Returns (array, l_out_real)."""
    b, l, c = x.shape
    l_out_real = l + 2 * CONV_PAD - (KERNEL_SIZE - 1)          # = l + 2
    l_out_pad = _round_up(l_out_real, SUBLANE)
    l_buf = l_out_pad + (KERNEL_SIZE - 1)
    xp = jnp.zeros((batch_pad, l_buf, c_pad), jnp.bfloat16)
    xp = xp.at[:b, CONV_PAD:CONV_PAD + l, :c].set(x.astype(jnp.bfloat16))
    return xp, l_out_real


def prep_kernel_params(params, c_pad, h_pad, out_pad):
    conv_w = params["conv_w"]          # (hidden, embed, 3)   torch Conv1d layout
    conv_b = params["conv_b"]          # (hidden,)
    lin_w = params["lin_w"]            # (out_dim, 3*hidden)  torch Linear layout
    lin_b = params["lin_b"]            # (out_dim,)
    hidden, embed, _ = conv_w.shape
    out_dim = lin_w.shape[0]

    # Conv weight: tap-major (3, embed, hidden), zero-padded lanes, bf16.
    wf = jnp.transpose(conv_w, (2, 1, 0))
    wf_p = jnp.zeros((KERNEL_SIZE, c_pad, h_pad), jnp.bfloat16)
    wf_p = wf_p.at[:, :embed, :hidden].set(wf.astype(jnp.bfloat16))

    cb_p = jnp.zeros((1, h_pad), jnp.float32).at[0, :hidden].set(conv_b)

    # PyTorch stack(dim=2).view(B,-1) is hidden-major / piece-minor: flat column
    # j = hd*3 + p of lin_w.  Reshape into per-piece (hidden, out_dim) blocks so
    # the kernel can do out = sum_p h_p @ lw[p].
    lw = jnp.transpose(lin_w.reshape(out_dim, hidden, NUM_PIECES), (2, 1, 0))
    lw_p = jnp.zeros((NUM_PIECES, h_pad, out_pad), jnp.bfloat16)
    lw_p = lw_p.at[:, :hidden, :out_dim].set(lw.astype(jnp.bfloat16))

    lb_p = jnp.zeros((1, out_pad), jnp.float32).at[0, :out_dim].set(lin_b)
    return wf_p, cb_p, lw_p, lb_p


def relation_classifier_forward(padded_c1, padded_c2, padded_c3, params,
                                *, block_batch=8):
    """padded_c{i}: (B, L_i, embed) f32 in NLC layout.  Returns (B, out_dim) f32."""
    batch, _, embed = padded_c1.shape
    hidden = params["conv_w"].shape[0]
    out_dim = params["lin_w"].shape[0]

    c_pad = _round_up(embed, LANE)
    h_pad = _round_up(hidden, LANE)
    out_pad = _round_up(out_dim, LANE)
    # Batch tile: multiple of 8 sublanes so the (TB, OUT_PAD) output block is
    # (8,128)-tile aligned (lane-dense, unmasked stores).
    tb = _round_up(min(block_batch, batch), SUBLANE)
    b_pad = _round_up(batch, tb)

    x1, lo1 = _prep_piece(padded_c1, c_pad, b_pad)
    x2, lo2 = _prep_piece(padded_c2, c_pad, b_pad)
    x3, lo3 = _prep_piece(padded_c3, c_pad, b_pad)
    wf, cb, lw, lb = prep_kernel_params(params, c_pad, h_pad, out_pad)

    kernel = functools.partial(fused_relation_kernel,
                               l_out_real=(lo1, lo2, lo3))

    def x_spec(x):
        return pl.BlockSpec((tb,) + x.shape[1:], lambda i: (i, 0, 0))

    out = pl.pallas_call(
        kernel,
        out_shape=jax.ShapeDtypeStruct((b_pad, out_pad), jnp.float32),
        grid=(b_pad // tb,),
        in_specs=[
            x_spec(x1), x_spec(x2), x_spec(x3),
            # Weights / biases: constant index_map -> stay VMEM-resident.
            pl.BlockSpec(wf.shape, lambda i: (0, 0, 0)),
            pl.BlockSpec(cb.shape, lambda i: (0, 0)),
            pl.BlockSpec(lw.shape, lambda i: (0, 0, 0)),
            pl.BlockSpec(lb.shape, lambda i: (0, 0)),
        ],
        out_specs=pl.BlockSpec((tb, out_pad), lambda i: (i, 0)),
        compiler_params=pltpu.CompilerParams(
            dimension_semantics=("parallel",),
            # Explicit scoped-VMEM budget; usage per step is < 1 MiB here, and
            # this cap is safe on v5e (16 MiB default) through v7x (64 MiB phys).
            vmem_limit_bytes=32 * 1024 * 1024),
    )(x1, x2, x3, wf, cb, lw, lb)
    return out[:batch, :out_dim]


# ---------------------------------------------------------------------------
# Deterministic parameter / input construction + pure-JAX reference
# ---------------------------------------------------------------------------
def make_params(key, embed_dim, hidden_dim, output_dim):
    k1, k2, k3, k4 = jax.random.split(key, 4)
    conv_w = 0.1 * jax.random.normal(
        k1, (hidden_dim, embed_dim, KERNEL_SIZE), jnp.float32)   # nn.Conv1d layout
    conv_b = 0.1 * jax.random.normal(k2, (hidden_dim,), jnp.float32)
    lin_w = 0.1 * jax.random.normal(
        k3, (output_dim, NUM_PIECES * hidden_dim), jnp.float32)  # nn.Linear layout
    lin_b = 0.1 * jax.random.normal(k4, (output_dim,), jnp.float32)
    return {"conv_w": conv_w, "conv_b": conv_b, "lin_w": lin_w, "lin_b": lin_b}


def make_padded_piece(key, batch, max_len, lengths, embed_dim):
    """Mimics _assemble_vec_seq + pad_sequence: random word vectors, zero-padded."""
    x = jax.random.normal(key, (batch, max_len, embed_dim), jnp.float32)
    pos = jnp.arange(max_len)[None, :, None]
    mask = (pos < jnp.asarray(lengths, jnp.int32)[:, None, None]).astype(jnp.float32)
    return x * mask


def reference_forward(padded_c1, padded_c2, padded_c3, params):
    """Pure-JAX f32 reference mirroring the PyTorch semantics exactly."""
    conv_w, conv_b = params["conv_w"], params["conv_b"]
    lin_w, lin_b = params["lin_w"], params["lin_b"]
    hi = jax.lax.Precision.HIGHEST

    def piece(x):                                            # (B, L, embed) NLC
        xp = jnp.pad(x, ((0, 0), (CONV_PAD, CONV_PAD), (0, 0)))
        l_out = x.shape[1] + 2 * CONV_PAD - (KERNEL_SIZE - 1)
        y = sum(jnp.einsum("blc,hc->blh", xp[:, k:k + l_out, :],
                           conv_w[:, :, k], precision=hi)
                for k in range(KERNEL_SIZE))
        y = y + conv_b[None, None, :]
        return jnp.tanh(jnp.max(y, axis=1))

    h = jnp.stack([piece(padded_c1), piece(padded_c2), piece(padded_c3)],
                  axis=2)                                    # (B, hidden, 3)
    h = h.reshape(h.shape[0], -1)                            # hidden-major/piece-minor
    return jnp.dot(h, lin_w.T, precision=hi) + lin_b[None, :]


if __name__ == "__main__":
    BATCH = 16          # 2 batch tiles of 8 -> exercises the parallel batch grid
    EMBED_DIM = 16
    HIDDEN_DIM = 32
    OUTPUT_DIM = 8

    key = jax.random.PRNGKey(0)
    kp, k1, k2, k3 = jax.random.split(key, 4)
    params = make_params(kp, EMBED_DIM, HIDDEN_DIM, OUTPUT_DIM)

    # Three context pieces (before / middle / after), variable lengths per example.
    len1 = [6, 4, 6, 5, 3, 6, 2, 6, 1, 6, 4, 5, 6, 3, 2, 6]
    len2 = [8, 8, 7, 5, 8, 6, 8, 4, 8, 8, 3, 8, 7, 8, 5, 8]
    len3 = [5, 3, 5, 5, 2, 4, 5, 1, 5, 3, 5, 5, 4, 2, 5, 5]
    padded_c1 = make_padded_piece(k1, BATCH, max(len1), len1, EMBED_DIM)
    padded_c2 = make_padded_piece(k2, BATCH, max(len2), len2, EMBED_DIM)
    padded_c3 = make_padded_piece(k3, BATCH, max(len3), len3, EMBED_DIM)

    out = relation_classifier_forward(padded_c1, padded_c2, padded_c3, params,
                                      block_batch=8)
    out = jax.block_until_ready(out)

    assert out.shape == (BATCH, OUTPUT_DIM), out.shape
    assert out.dtype == jnp.float32

    ref = reference_forward(padded_c1, padded_c2, padded_c3, params)
    # bf16 MXU operands / bf16-quantized inputs vs. the f32 HIGHEST reference:
    # small differences are expected and covered by this tolerance.
    max_err = float(jnp.max(jnp.abs(out - ref)))
    assert jnp.allclose(out, ref, atol=2e-2, rtol=2e-2), max_err

    print("KERNEL_OK")
</pallas_src>

<mosaic_0001>
module attributes {stable_mosaic.version = 11 : i64} {
  func.func @fused_relation_kernel(%arg0: i32, %arg1: memref<8x10x128xbf16, #tpu.memory_space<vmem>>, %arg2: memref<8x18x128xbf16, #tpu.memory_space<vmem>>, %arg3: memref<8x10x128xbf16, #tpu.memory_space<vmem>>, %arg4: memref<3x128x128xbf16, #tpu.memory_space<vmem>>, %arg5: memref<1x128xf32, #tpu.memory_space<vmem>>, %arg6: memref<3x128x128xbf16, #tpu.memory_space<vmem>>, %arg7: memref<1x128xf32, #tpu.memory_space<vmem>>, %arg8: memref<8x128xf32, #tpu.memory_space<vmem>>) attributes {dimension_semantics = [#tpu.dimension_semantics<parallel>], iteration_bounds = array<i64: 2>, scalar_prefetch = 0 : i64, scratch_operands = 0 : i64, tpu.core_type = #tpu.core_type<tc>, window_params = [{transform_indices = @transform_0, window_bounds = array<i64: 8, 10, 128>}, {transform_indices = @transform_1, window_bounds = array<i64: 8, 18, 128>}, {transform_indices = @transform_2, window_bounds = array<i64: 8, 10, 128>}, {pipeline_mode = #tpu.pipeline_mode<synchronous>, transform_indices = @transform_3, window_bounds = array<i64: 3, 128, 128>}, {pipeline_mode = #tpu.pipeline_mode<synchronous>, transform_indices = @transform_4, window_bounds = array<i64: 1, 128>}, {pipeline_mode = #tpu.pipeline_mode<synchronous>, transform_indices = @transform_5, window_bounds = array<i64: 3, 128, 128>}, {pipeline_mode = #tpu.pipeline_mode<synchronous>, transform_indices = @transform_6, window_bounds = array<i64: 1, 128>}, {transform_indices = @transform_7, window_bounds = array<i64: 8, 128>}]} {
    %c0 = arith.constant 0 : index
    %c0_0 = arith.constant 0 : index
    %0 = vector.load %arg5[%c0, %c0_0] : memref<1x128xf32, #tpu.memory_space<vmem>>, vector<1x128xf32>
    %c0_1 = arith.constant 0 : index
    %c0_2 = arith.constant 0 : index
    %c0_3 = arith.constant 0 : index
    %1 = vector.load %arg1[%c0_1, %c0_2, %c0_3] : memref<8x10x128xbf16, #tpu.memory_space<vmem>>, vector<8x10x128xbf16>
    %2 = vector.extract_strided_slice %1 {offsets = [0, 0, 0], sizes = [8, 8, 128], strides = [1, 1, 1]} : vector<8x10x128xbf16> to vector<8x8x128xbf16>
    %3 = vector.shape_cast %2 : vector<8x8x128xbf16> to vector<64x128xbf16>
    %c0_4 = arith.constant 0 : index
    %c0_5 = arith.constant 0 : index
    %c0_6 = arith.constant 0 : index
    %4 = vector.load %arg4[%c0_4, %c0_5, %c0_6] : memref<3x128x128xbf16, #tpu.memory_space<vmem>>, vector<1x128x128xbf16>
    %5 = vector.shape_cast %4 : vector<1x128x128xbf16> to vector<128x128xbf16>
    %cst = arith.constant dense<0.000000e+00> : vector<64x128xf32>
    %6 = tpu.matmul %3, %5, %cst {dimension_numbers = #tpu.dot_dimension_numbers<[1], [0], [0], [1], [0, 0, 1, 1], [], []>} : vector<64x128xbf16>, vector<128x128xbf16>, vector<64x128xf32> -> vector<64x128xf32>
    %7 = vector.extract_strided_slice %1 {offsets = [0, 1, 0], sizes = [8, 8, 128], strides = [1, 1, 1]} : vector<8x10x128xbf16> to vector<8x8x128xbf16>
    %8 = vector.shape_cast %7 : vector<8x8x128xbf16> to vector<64x128xbf16>
    %c1 = arith.constant 1 : index
    %c0_7 = arith.constant 0 : index
    %c0_8 = arith.constant 0 : index
    %9 = vector.load %arg4[%c1, %c0_7, %c0_8] : memref<3x128x128xbf16, #tpu.memory_space<vmem>>, vector<1x128x128xbf16>
    %10 = vector.shape_cast %9 : vector<1x128x128xbf16> to vector<128x128xbf16>
    %cst_9 = arith.constant dense<0.000000e+00> : vector<64x128xf32>
    %11 = tpu.matmul %8, %10, %cst_9 {dimension_numbers = #tpu.dot_dimension_numbers<[1], [0], [0], [1], [0, 0, 1, 1], [], []>} : vector<64x128xbf16>, vector<128x128xbf16>, vector<64x128xf32> -> vector<64x128xf32>
    %12 = arith.addf %6, %11 : vector<64x128xf32>
    %13 = vector.extract_strided_slice %1 {offsets = [0, 2, 0], sizes = [8, 8, 128], strides = [1, 1, 1]} : vector<8x10x128xbf16> to vector<8x8x128xbf16>
    %14 = vector.shape_cast %13 : vector<8x8x128xbf16> to vector<64x128xbf16>
    %c2 = arith.constant 2 : index
    %c0_10 = arith.constant 0 : index
    %c0_11 = arith.constant 0 : index
    %15 = vector.load %arg4[%c2, %c0_10, %c0_11] : memref<3x128x128xbf16, #tpu.memory_space<vmem>>, vector<1x128x128xbf16>
    %16 = vector.shape_cast %15 : vector<1x128x128xbf16> to vector<128x128xbf16>
    %cst_12 = arith.constant dense<0.000000e+00> : vector<64x128xf32>
    %17 = tpu.matmul %14, %16, %cst_12 {dimension_numbers = #tpu.dot_dimension_numbers<[1], [0], [0], [1], [0, 0, 1, 1], [], []>} : vector<64x128xbf16>, vector<128x128xbf16>, vector<64x128xf32> -> vector<64x128xf32>
    %18 = arith.addf %12, %17 : vector<64x128xf32>
    %19 = vector.shape_cast %18 : vector<64x128xf32> to vector<8x8x128xf32>
    %20 = tpu.iota {dimensions = array<i32: 1>} : vector<8x8x128xi32>
    %c8_i32 = arith.constant 8 : i32
    %21 = vector.broadcast %c8_i32 : i32 to vector<8x8x128xi32>
    %22 = arith.cmpi slt, %20, %21 : vector<8x8x128xi32>
    %cst_13 = arith.constant 0xFF800000 : f32
    %23 = vector.broadcast %cst_13 : f32 to vector<8x8x128xf32>
    %24 = arith.select %22, %19, %23 : vector<8x8x128xi1>, vector<8x8x128xf32>
    %cst_14 = arith.constant dense<0xFF800000> : vector<8x128xf32>
    %25 = vector.multi_reduction <maximumf>, %24, %cst_14 [1] : vector<8x8x128xf32> to vector<8x128xf32>
    %26 = vector.broadcast %0 : vector<1x128xf32> to vector<8x128xf32>
    %27 = arith.addf %25, %26 : vector<8x128xf32>
    %28 = math.tanh %27 : vector<8x128xf32>
    %c0_15 = arith.constant 0 : index
    %c0_16 = arith.constant 0 : index
    %c0_17 = arith.constant 0 : index
    %29 = vector.load %arg2[%c0_15, %c0_16, %c0_17] : memref<8x18x128xbf16, #tpu.memory_space<vmem>>, vector<8x18x128xbf16>
    %30 = vector.extract_strided_slice %29 {offsets = [0, 0, 0], sizes = [8, 16, 128], strides = [1, 1, 1]} : vector<8x18x128xbf16> to vector<8x16x128xbf16>
    %31 = vector.shape_cast %30 : vector<8x16x128xbf16> to vector<128x128xbf16>
    %c0_18 = arith.constant 0 : index
    %c0_19 = arith.constant 0 : index
    %c0_20 = arith.constant 0 : index
    %32 = vector.load %arg4[%c0_18, %c0_19, %c0_20] : memref<3x128x128xbf16, #tpu.memory_space<vmem>>, vector<1x128x128xbf16>
    %33 = vector.shape_cast %32 : vector<1x128x128xbf16> to vector<128x128xbf16>
    %cst_21 = arith.constant dense<0.000000e+00> : vector<128x128xf32>
    %34 = tpu.matmul %31, %33, %cst_21 {dimension_numbers = #tpu.dot_dimension_numbers<[1], [0], [0], [1], [0, 0, 1, 1], [], []>} : vector<128x128xbf16>, vector<128x128xbf16>, vector<128x128xf32> -> vector<128x128xf32>
    %35 = vector.extract_strided_slice %29 {offsets = [0, 1, 0], sizes = [8, 16, 128], strides = [1, 1, 1]} : vector<8x18x128xbf16> to vector<8x16x128xbf16>
    %36 = vector.shape_cast %35 : vector<8x16x128xbf16> to vector<128x128xbf16>
    %c1_22 = arith.constant 1 : index
    %c0_23 = arith.constant 0 : index
    %c0_24 = arith.constant 0 : index
    %37 = vector.load %arg4[%c1_22, %c0_23, %c0_24] : memref<3x128x128xbf16, #tpu.memory_space<vmem>>, vector<1x128x128xbf16>
    %38 = vector.shape_cast %37 : vector<1x128x128xbf16> to vector<128x128xbf16>
    %cst_25 = arith.constant dense<0.000000e+00> : vector<128x128xf32>
    %39 = tpu.matmul %36, %38, %cst_25 {dimension_numbers = #tpu.dot_dimension_numbers<[1], [0], [0], [1], [0, 0, 1, 1], [], []>} : vector<128x128xbf16>, vector<128x128xbf16>, vector<128x128xf32> -> vector<128x128xf32>
    %40 = arith.addf %34, %39 : vector<128x128xf32>
    %41 = vector.extract_strided_slice %29 {offsets = [0, 2, 0], sizes = [8, 16, 128], strides = [1, 1, 1]} : vector<8x18x128xbf16> to vector<8x16x128xbf16>
    %42 = vector.shape_cast %41 : vector<8x16x128xbf16> to vector<128x128xbf16>
    %c2_26 = arith.constant 2 : index
    %c0_27 = arith.constant 0 : index
    %c0_28 = arith.constant 0 : index
    %43 = vector.load %arg4[%c2_26, %c0_27, %c0_28] : memref<3x128x128xbf16, #tpu.memory_space<vmem>>, vector<1x128x128xbf16>
    %44 = vector.shape_cast %43 : vector<1x128x128xbf16> to vector<128x128xbf16>
    %cst_29 = arith.constant dense<0.000000e+00> : vector<128x128xf32>
    %45 = tpu.matmul %42, %44, %cst_29 {dimension_numbers = #tpu.dot_dimension_numbers<[1], [0], [0], [1], [0, 0, 1, 1], [], []>} : vector<128x128xbf16>, vector<128x128xbf16>, vector<128x128xf32> -> vector<128x128xf32>
    %46 = arith.addf %40, %45 : vector<128x128xf32>
    %47 = vector.shape_cast %46 : vector<128x128xf32> to vector<8x16x128xf32>
    %48 = tpu.iota {dimensions = array<i32: 1>} : vector<8x16x128xi32>
    %c10_i32 = arith.constant 10 : i32
    %49 = vector.broadcast %c10_i32 : i32 to vector<8x16x128xi32>
    %50 = arith.cmpi slt, %48, %49 : vector<8x16x128xi32>
    %cst_30 = arith.constant 0xFF800000 : f32
    %51 = vector.broadcast %cst_30 : f32 to vector<8x16x128xf32>
    %52 = arith.select %50, %47, %51 : vector<8x16x128xi1>, vector<8x16x128xf32>
    %cst_31 = arith.constant dense<0xFF800000> : vector<8x128xf32>
    %53 = vector.multi_reduction <maximumf>, %52, %cst_31 [1] : vector<8x16x128xf32> to vector<8x128xf32>
    %54 = vector.broadcast %0 : vector<1x128xf32> to vector<8x128xf32>
    %55 = arith.addf %53, %54 : vector<8x128xf32>
    %56 = math.tanh %55 : vector<8x128xf32>
    %c0_32 = arith.constant 0 : index
    %c0_33 = arith.constant 0 : index
    %c0_34 = arith.constant 0 : index
    %57 = vector.load %arg3[%c0_32, %c0_33, %c0_34] : memref<8x10x128xbf16, #tpu.memory_space<vmem>>, vector<8x10x128xbf16>
    %58 = vector.extract_strided_slice %57 {offsets = [0, 0, 0], sizes = [8, 8, 128], strides = [1, 1, 1]} : vector<8x10x128xbf16> to vector<8x8x128xbf16>
    %59 = vector.shape_cast %58 : vector<8x8x128xbf16> to vector<64x128xbf16>
    %c0_35 = arith.constant 0 : index
    %c0_36 = arith.constant 0 : index
    %c0_37 = arith.constant 0 : index
    %60 = vector.load %arg4[%c0_35, %c0_36, %c0_37] : memref<3x128x128xbf16, #tpu.memory_space<vmem>>, vector<1x128x128xbf16>
    %61 = vector.shape_cast %60 : vector<1x128x128xbf16> to vector<128x128xbf16>
    %cst_38 = arith.constant dense<0.000000e+00> : vector<64x128xf32>
    %62 = tpu.matmul %59, %61, %cst_38 {dimension_numbers = #tpu.dot_dimension_numbers<[1], [0], [0], [1], [0, 0, 1, 1], [], []>} : vector<64x128xbf16>, vector<128x128xbf16>, vector<64x128xf32> -> vector<64x128xf32>
    %63 = vector.extract_strided_slice %57 {offsets = [0, 1, 0], sizes = [8, 8, 128], strides = [1, 1, 1]} : vector<8x10x128xbf16> to vector<8x8x128xbf16>
    %64 = vector.shape_cast %63 : vector<8x8x128xbf16> to vector<64x128xbf16>
    %c1_39 = arith.constant 1 : index
    %c0_40 = arith.constant 0 : index
    %c0_41 = arith.constant 0 : index
    %65 = vector.load %arg4[%c1_39, %c0_40, %c0_41] : memref<3x128x128xbf16, #tpu.memory_space<vmem>>, vector<1x128x128xbf16>
    %66 = vector.shape_cast %65 : vector<1x128x128xbf16> to vector<128x128xbf16>
    %cst_42 = arith.constant dense<0.000000e+00> : vector<64x128xf32>
    %67 = tpu.matmul %64, %66, %cst_42 {dimension_numbers = #tpu.dot_dimension_numbers<[1], [0], [0], [1], [0, 0, 1, 1], [], []>} : vector<64x128xbf16>, vector<128x128xbf16>, vector<64x128xf32> -> vector<64x128xf32>
    %68 = arith.addf %62, %67 : vector<64x128xf32>
    %69 = vector.extract_strided_slice %57 {offsets = [0, 2, 0], sizes = [8, 8, 128], strides = [1, 1, 1]} : vector<8x10x128xbf16> to vector<8x8x128xbf16>
    %70 = vector.shape_cast %69 : vector<8x8x128xbf16> to vector<64x128xbf16>
    %c2_43 = arith.constant 2 : index
    %c0_44 = arith.constant 0 : index
    %c0_45 = arith.constant 0 : index
    %71 = vector.load %arg4[%c2_43, %c0_44, %c0_45] : memref<3x128x128xbf16, #tpu.memory_space<vmem>>, vector<1x128x128xbf16>
    %72 = vector.shape_cast %71 : vector<1x128x128xbf16> to vector<128x128xbf16>
    %cst_46 = arith.constant dense<0.000000e+00> : vector<64x128xf32>
    %73 = tpu.matmul %70, %72, %cst_46 {dimension_numbers = #tpu.dot_dimension_numbers<[1], [0], [0], [1], [0, 0, 1, 1], [], []>} : vector<64x128xbf16>, vector<128x128xbf16>, vector<64x128xf32> -> vector<64x128xf32>
    %74 = arith.addf %68, %73 : vector<64x128xf32>
    %75 = vector.shape_cast %74 : vector<64x128xf32> to vector<8x8x128xf32>
    %76 = tpu.iota {dimensions = array<i32: 1>} : vector<8x8x128xi32>
    %c7_i32 = arith.constant 7 : i32
    %77 = vector.broadcast %c7_i32 : i32 to vector<8x8x128xi32>
    %78 = arith.cmpi slt, %76, %77 : vector<8x8x128xi32>
    %cst_47 = arith.constant 0xFF800000 : f32
    %79 = vector.broadcast %cst_47 : f32 to vector<8x8x128xf32>
    %80 = arith.select %78, %75, %79 : vector<8x8x128xi1>, vector<8x8x128xf32>
    %cst_48 = arith.constant dense<0xFF800000> : vector<8x128xf32>
    %81 = vector.multi_reduction <maximumf>, %80, %cst_48 [1] : vector<8x8x128xf32> to vector<8x128xf32>
    %82 = vector.broadcast %0 : vector<1x128xf32> to vector<8x128xf32>
    %83 = arith.addf %81, %82 : vector<8x128xf32>
    %84 = math.tanh %83 : vector<8x128xf32>
    %85 = arith.truncf %28 : vector<8x128xf32> to vector<8x128xbf16>
    %c0_49 = arith.constant 0 : index
    %c0_50 = arith.constant 0 : index
    %c0_51 = arith.constant 0 : index
    %86 = vector.load %arg6[%c0_49, %c0_50, %c0_51] : memref<3x128x128xbf16, #tpu.memory_space<vmem>>, vector<1x128x128xbf16>
    %87 = vector.shape_cast %86 : vector<1x128x128xbf16> to vector<128x128xbf16>
    %cst_52 = arith.constant dense<0.000000e+00> : vector<8x128xf32>
    %88 = tpu.matmul %85, %87, %cst_52 {dimension_numbers = #tpu.dot_dimension_numbers<[1], [0], [0], [1], [0, 0, 1, 1], [], []>} : vector<8x128xbf16>, vector<128x128xbf16>, vector<8x128xf32> -> vector<8x128xf32>
    %89 = arith.truncf %56 : vector<8x128xf32> to vector<8x128xbf16>
    %c1_53 = arith.constant 1 : index
    %c0_54 = arith.constant 0 : index
    %c0_55 = arith.constant 0 : index
    %90 = vector.load %arg6[%c1_53, %c0_54, %c0_55] : memref<3x128x128xbf16, #tpu.memory_space<vmem>>, vector<1x128x128xbf16>
    %91 = vector.shape_cast %90 : vector<1x128x128xbf16> to vector<128x128xbf16>
    %cst_56 = arith.constant dense<0.000000e+00> : vector<8x128xf32>
    %92 = tpu.matmul %89, %91, %cst_56 {dimension_numbers = #tpu.dot_dimension_numbers<[1], [0], [0], [1], [0, 0, 1, 1], [], []>} : vector<8x128xbf16>, vector<128x128xbf16>, vector<8x128xf32> -> vector<8x128xf32>
    %93 = arith.addf %88, %92 : vector<8x128xf32>
    %94 = arith.truncf %84 : vector<8x128xf32> to vector<8x128xbf16>
    %c2_57 = arith.constant 2 : index
    %c0_58 = arith.constant 0 : index
    %c0_59 = arith.constant 0 : index
    %95 = vector.load %arg6[%c2_57, %c0_58, %c0_59] : memref<3x128x128xbf16, #tpu.memory_space<vmem>>, vector<1x128x128xbf16>
    %96 = vector.shape_cast %95 : vector<1x128x128xbf16> to vector<128x128xbf16>
    %cst_60 = arith.constant dense<0.000000e+00> : vector<8x128xf32>
    %97 = tpu.matmul %94, %96, %cst_60 {dimension_numbers = #tpu.dot_dimension_numbers<[1], [0], [0], [1], [0, 0, 1, 1], [], []>} : vector<8x128xbf16>, vector<128x128xbf16>, vector<8x128xf32> -> vector<8x128xf32>
    %98 = arith.addf %93, %97 : vector<8x128xf32>
    %c0_61 = arith.constant 0 : index
    %c0_62 = arith.constant 0 : index
    %99 = vector.load %arg7[%c0_61, %c0_62] : memref<1x128xf32, #tpu.memory_space<vmem>>, vector<1x128xf32>
    %100 = vector.broadcast %99 : vector<1x128xf32> to vector<8x128xf32>
    %101 = arith.addf %98, %100 : vector<8x128xf32>
    %c0_63 = arith.constant 0 : index
    %c0_64 = arith.constant 0 : index
    %102 = vector.load %arg8[%c0_63, %c0_64] : memref<8x128xf32, #tpu.memory_space<vmem>>, vector<8x128xf32>
    tpu.vector_store %arg8[%c0_63, %c0_64], %101 {strides = array<i32>} : memref<8x128xf32, #tpu.memory_space<vmem>>, vector<8x128xf32>,
    return
  }
  func.func @transform_0(%arg0: i32) -> (i32, i32, i32) {
    %c0_i32 = arith.constant 0 : i32
    %c0_i32_0 = arith.constant 0 : i32
    %c0_i32_1 = arith.constant 0 : i32
    return %arg0, %c0_i32, %c0_i32_0 : i32, i32, i32
  }
  func.func @transform_1(%arg0: i32) -> (i32, i32, i32) {
    %c0_i32 = arith.constant 0 : i32
    %c0_i32_0 = arith.constant 0 : i32
    %c0_i32_1 = arith.constant 0 : i32
    return %arg0, %c0_i32, %c0_i32_0 : i32, i32, i32
  }
  func.func @transform_2(%arg0: i32) -> (i32, i32, i32) {
    %c0_i32 = arith.constant 0 : i32
    %c0_i32_0 = arith.constant 0 : i32
    %c0_i32_1 = arith.constant 0 : i32
    return %arg0, %c0_i32, %c0_i32_0 : i32, i32, i32
  }
  func.func @transform_3(%arg0: i32) -> (i32, i32, i32) {
    %c0_i32 = arith.constant 0 : i32
    %c0_i32_0 = arith.constant 0 : i32
    %c0_i32_1 = arith.constant 0 : i32
    %c0_i32_2 = arith.constant 0 : i32
    return %c0_i32, %c0_i32_0, %c0_i32_1 : i32, i32, i32
  }
  func.func @transform_4(%arg0: i32) -> (i32, i32) {
    %c0_i32 = arith.constant 0 : i32
    %c0_i32_0 = arith.constant 0 : i32
    %c0_i32_1 = arith.constant 0 : i32
    return %c0_i32, %c0_i32_0 : i32, i32
  }
  func.func @transform_5(%arg0: i32) -> (i32, i32, i32) {
    %c0_i32 = arith.constant 0 : i32
    %c0_i32_0 = arith.constant 0 : i32
    %c0_i32_1 = arith.constant 0 : i32
    %c0_i32_2 = arith.constant 0 : i32
    return %c0_i32, %c0_i32_0, %c0_i32_1 : i32, i32, i32
  }
  func.func @transform_6(%arg0: i32) -> (i32, i32) {
    %c0_i32 = arith.constant 0 : i32
    %c0_i32_0 = arith.constant 0 : i32
    %c0_i32_1 = arith.constant 0 : i32
    return %c0_i32, %c0_i32_0 : i32, i32
  }
  func.func @transform_7(%arg0: i32) -> (i32, i32) {
    %c0_i32 = arith.constant 0 : i32
    %c0_i32_0 = arith.constant 0 : i32
    return %arg0, %c0_i32 : i32, i32
  }
}

</mosaic_0001>

<llo_original>
// kernel: tpu_custom_call.1
$region0: #{tpu_custom_call.1}
  #allocation0 [shape = 'u32[]', space=smem, size = 0x4, offset = 0x4, fixed_abs, tag = 'smem constant byte address 0x4 - core index']
  #allocation1 [shape = 'u32[144,128]{1,0:T(1,128)}', space=vmem, size = 0x12000, scoped, tag = 'internal scratch']
  %s0 = inlined_call_operand.vmem [shape: bf16[16,10,128], index: 0, kind: input, shape index: {}]
  %s1 = inlined_call_operand.vmem [shape: bf16[16,18,128], index: 1, kind: input, shape index: {}]
  %s2 = inlined_call_operand.vmem [shape: bf16[16,10,128], index: 2, kind: input, shape index: {}]
  %s3 = inlined_call_operand.vmem [shape: bf16[3,128,128], index: 3, kind: input, shape index: {}]
  %s4 = inlined_call_operand.vmem [shape: f32[1,128], index: 4, kind: input, shape index: {}]
  %s5 = inlined_call_operand.vmem [shape: bf16[3,128,128], index: 5, kind: input, shape index: {}]
  %s6 = inlined_call_operand.vmem [shape: f32[1,128], index: 6, kind: input, shape index: {}]
  %s7 = inlined_call_operand.hbm [shape: f32[16,128], index: 7, kind: output, shape index: {}]
  %s8 = sld [smem:[#allocation0]]
  $region61: #{tpu_custom_call.1} parent=0
    _
  %s10 = ssub.s32 1, %s8
  %s11 = scalar_select 0, %s10, %s8
  $region1: #{tpu_custom_call.1} parent=0
    #allocation2 [shape = 'u8[8192]{0}', space=vmem, size = 0x2000, scoped, tag = 'output window, operand 0']
    #allocation3 [shape = 's32[2]{0}', space=sflag, size = 0x8, scoped, tag = 'scoped memory for tpu_custom_call.1']
    %12 = vsyncpa [#allocation3], 0
    %s13 = scalar_lea.sflag [#allocation3], 1
    %14 = vsyncpa %s13, 0
    loop: start=0, step=1, limit=4
    $region2: #{tpu_custom_call.1} parent=1 // loop_pre_header
      _
    $region3: #{tpu_custom_call.1} parent=1 // loop_header
      %s16 = sphi 0, %s20
      %p17 = scmp.ge.s32.totalorder %s16, 4
      %s26 = sphi 0, %s28
      %s29 = sphi 0, %s26
      %s30 = sphi 0, %s29
      %s46 = sphi 0, %s30
      %s52 = sphi 0, %s54
      %s55 = sphi 0, %s52
      %s56 = sphi 0, %s55
      %s72 = sphi 0, %s56
      %s78 = sphi 0, %s80
      %s81 = sphi 0, %s78
      %s82 = sphi 0, %s81
      %s98 = sphi 0, %s82
      %s102 = sphi 0, %s102
      %s104 = sphi 0, %s102
      %s105 = sphi 0, %s104
      %s119 = sphi 0, %s105
      %s123 = sphi 0, %s123
      %s125 = sphi 0, %s123
      %s126 = sphi 0, %s125
      %s140 = sphi 0, %s126
      %s144 = sphi 0, %s144
      %s146 = sphi 0, %s144
      %s147 = sphi 0, %s146
      %s161 = sphi 0, %s147
      %s165 = sphi 0, %s165
      %s167 = sphi 0, %s165
      %s168 = sphi 0, %s167
      %s182 = sphi 0, %s168
      %s188 = sphi 0, %s190
      %s191 = sphi 0, %s188
      %s192 = sphi 0, %s191
      %s208 = sphi 0, %s192
    $region4: #{tpu_custom_call.1} parent=1 // loop_header_branch
      %19 = sbr.rel (%p17) target = $region8
    $region5: #{tpu_custom_call.1} parent=1 // loop_body
      %s21 = ssub.s32 %s16, 1
      %s22 = ssub.s32 %s16, 2
      %s23 = sadd.s32 %s16, 1
      %s24 = ssub.s32 %s16, %s23
      %p25 = scmp.eq.s32.totalorder %s24, 0
      %s27 = sadd.s32 %s26, 1
      %s28 = scalar_select %p25, %s26, %s27
      %p31 = pneg %p25
      %p32 = scmp.eq.s32.totalorder %s16, 1
      %p33 = por %p31, %p32
      %p34 = scmp.ne.s32.totalorder %s26, %s29
      %p35 = scmp.eq.s32.totalorder %s16, 0
      %p36 = por %p34, %p35
      %p37 = scmp.ne.s32.totalorder %s26, %s29
      %p38 = scmp.eq.s32.totalorder %s21, 1
      %p39 = por %p37, %p38
      %p40 = scmp.ne.s32.totalorder %s29, %s30
      %p41 = scmp.eq.s32.totalorder %s21, 0
      %p42 = por %p40, %p41
      %p43 = scmp.ne.s32.totalorder %s29, %s30
      %p44 = scmp.eq.s32.totalorder %s22, 1
      %p45 = por %p43, %p44
      %p47 = scmp.ne.s32.totalorder %s30, %s46
      %p48 = scmp.eq.s32.totalorder %s22, 0
      %p49 = por %p47, %p48
      %s50 = ssub.s32 %s16, %s23
      %p51 = scmp.eq.s32.totalorder %s50, 0
      %s53 = sadd.s32 %s52, 1
      %s54 = scalar_select %p51, %s52, %s53
      %p57 = pneg %p51
      %p58 = scmp.eq.s32.totalorder %s16, 1
      %p59 = por %p57, %p58
      %p60 = scmp.ne.s32.totalorder %s52, %s55
      %p61 = scmp.eq.s32.totalorder %s16, 0
      %p62 = por %p60, %p61
      %p63 = scmp.ne.s32.totalorder %s52, %s55
      %p64 = scmp.eq.s32.totalorder %s21, 1
      %p65 = por %p63, %p64
      %p66 = scmp.ne.s32.totalorder %s55, %s56
      %p67 = scmp.eq.s32.totalorder %s21, 0
      %p68 = por %p66, %p67
      %p69 = scmp.ne.s32.totalorder %s55, %s56
      %p70 = scmp.eq.s32.totalorder %s22, 1
      %p71 = por %p69, %p70
      %p73 = scmp.ne.s32.totalorder %s56, %s72
      %p74 = scmp.eq.s32.totalorder %s22, 0
      %p75 = por %p73, %p74
      %s76 = ssub.s32 %s16, %s23
      %p77 = scmp.eq.s32.totalorder %s76, 0
      %s79 = sadd.s32 %s78, 1
      %s80 = scalar_select %p77, %s78, %s79
      %p83 = pneg %p77
      %p84 = scmp.eq.s32.totalorder %s16, 1
      %p85 = por %p83, %p84
      %p86 = scmp.ne.s32.totalorder %s78, %s81
      %p87 = scmp.eq.s32.totalorder %s16, 0
      %p88 = por %p86, %p87
      %p89 = scmp.ne.s32.totalorder %s78, %s81
      %p90 = scmp.eq.s32.totalorder %s21, 1
      %p91 = por %p89, %p90
      %p92 = scmp.ne.s32.totalorder %s81, %s82
      %p93 = scmp.eq.s32.totalorder %s21, 0
      %p94 = por %p92, %p93
      %p95 = scmp.ne.s32.totalorder %s81, %s82
      %p96 = scmp.eq.s32.totalorder %s22, 1
      %p97 = por %p95, %p96
      %p99 = scmp.ne.s32.totalorder %s82, %s98
      %p100 = scmp.eq.s32.totalorder %s22, 0
      %p101 = por %p99, %p100
      %s103 = sadd.s32 %s102, 1
      %p106 = scmp.eq.s32.totalorder %s16, 1
      %p107 = scmp.ne.s32.totalorder %s102, %s104
      %p108 = scmp.eq.s32.totalorder %s16, 0
      %p109 = por %p107, %p108
      %p110 = scmp.ne.s32.totalorder %s102, %s104
      %p111 = scmp.eq.s32.totalorder %s21, 1
      %p112 = por %p110, %p111
      %p113 = scmp.ne.s32.totalorder %s104, %s105
      %p114 = scmp.eq.s32.totalorder %s21, 0
      %p115 = por %p113, %p114
      %p116 = scmp.ne.s32.totalorder %s104, %s105
      %p117 = scmp.eq.s32.totalorder %s22, 1
      %p118 = por %p116, %p117
      %p120 = scmp.ne.s32.totalorder %s105, %s119
      %p121 = scmp.eq.s32.totalorder %s22, 0
      %p122 = por %p120, %p121
      %s124 = sadd.s32 %s123, 1
      %p127 = scmp.eq.s32.totalorder %s16, 1
      %p128 = scmp.ne.s32.totalorder %s123, %s125
      %p129 = scmp.eq.s32.totalorder %s16, 0
      %p130 = por %p128, %p129
      %p131 = scmp.ne.s32.totalorder %s123, %s125
      %p132 = scmp.eq.s32.totalorder %s21, 1
      %p133 = por %p131, %p132
      %p134 = scmp.ne.s32.totalorder %s125, %s126
      %p135 = scmp.eq.s32.totalorder %s21, 0
      %p136 = por %p134, %p135
      %p137 = scmp.ne.s32.totalorder %s125, %s126
      %p138 = scmp.eq.s32.totalorder %s22, 1
      %p139 = por %p137, %p138
      %p141 = scmp.ne.s32.totalorder %s126, %s140
      %p142 = scmp.eq.s32.totalorder %s22, 0
      %p143 = por %p141, %p142
      %s145 = sadd.s32 %s144, 1
      %p148 = scmp.eq.s32.totalorder %s16, 1
      %p149 = scmp.ne.s32.totalorder %s144, %s146
      %p150 = scmp.eq.s32.totalorder %s16, 0
      %p151 = por %p149, %p150
      %p152 = scmp.ne.s32.totalorder %s144, %s146
      %p153 = scmp.eq.s32.totalorder %s21, 1
      %p154 = por %p152, %p153
      %p155 = scmp.ne.s32.totalorder %s146, %s147
      %p156 = scmp.eq.s32.totalorder %s21, 0
      %p157 = por %p155, %p156
      %p158 = scmp.ne.s32.totalorder %s146, %s147
      %p159 = scmp.eq.s32.totalorder %s22, 1
      %p160 = por %p158, %p159
      %p162 = scmp.ne.s32.totalorder %s147, %s161
      %p163 = scmp.eq.s32.totalorder %s22, 0
      %p164 = por %p162, %p163
      %s166 = sadd.s32 %s165, 1
      %p169 = scmp.eq.s32.totalorder %s16, 1
      %p170 = scmp.ne.s32.totalorder %s165, %s167
      %p171 = scmp.eq.s32.totalorder %s16, 0
      %p172 = por %p170, %p171
      %p173 = scmp.ne.s32.totalorder %s165, %s167
      %p174 = scmp.eq.s32.totalorder %s21, 1
      %p175 = por %p173, %p174
      %p176 = scmp.ne.s32.totalorder %s167, %s168
      %p177 = scmp.eq.s32.totalorder %s21, 0
      %p178 = por %p176, %p177
      %p179 = scmp.ne.s32.totalorder %s167, %s168
      %p180 = scmp.eq.s32.totalorder %s22, 1
      %p181 = por %p179, %p180
      %p183 = scmp.ne.s32.totalorder %s168, %s182
      %p184 = scmp.eq.s32.totalorder %s22, 0
      %p185 = por %p183, %p184
      %s186 = ssub.s32 %s16, %s23
      %p187 = scmp.eq.s32.totalorder %s186, 0
      %s189 = sadd.s32 %s188, 1
      %s190 = scalar_select %p187, %s188, %s189
      %p193 = pneg %p187
      %p194 = scmp.eq.s32.totalorder %s16, 1
      %p195 = por %p193, %p194
      %p196 = scmp.ne.s32.totalorder %s188, %s191
      %p197 = scmp.eq.s32.totalorder %s16, 0
      %p198 = por %p196, %p197
      %p199 = scmp.ne.s32.totalorder %s188, %s191
      %p200 = scmp.eq.s32.totalorder %s21, 1
      %p201 = por %p199, %p200
      %p202 = scmp.ne.s32.totalorder %s191, %s192
      %p203 = scmp.eq.s32.totalorder %s21, 0
      %p204 = por %p202, %p203
      %p205 = scmp.ne.s32.totalorder %s191, %s192
      %p206 = scmp.eq.s32.totalorder %s22, 1
      %p207 = por %p205, %p206
      %p209 = scmp.ne.s32.totalorder %s192, %s208
      %p210 = scmp.eq.s32.totalorder %s22, 0
      %p211 = por %p209, %p210
      %p212 = scmp.le.s32.totalorder 1, %s16
      %p213 = scmp.lt.s32.totalorder %s16, 3
      %p214 = pnand %p212, %p213
      %p215 = pneg %p214
      // Predicated region
      $region9: #{tpu_custom_call.1} parent=5 // pred_check
        _
      $region10: #{tpu_custom_call.1} parent=5 // pred_check_branch
        %217 = sbr.rel (%p214) target = $region12
      $region11: #{tpu_custom_call.1} parent=5 // pred_region
        %s218 = ssub.s32 %s16, 1
        // Predicated region
        $region13: #{tpu_custom_call.1} parent=11 // pred_check
          %p219 = pneg %p115
        $region14: #{tpu_custom_call.1} parent=11 // pred_check_branch
          %221 = sbr.rel (%p219) target = $region16
        $region15: #{tpu_custom_call.1} parent=11 // pred_region
          _
        $region16: #{tpu_custom_call.1} parent=11 // pred_fallthru
          _
        // Predicated region
        $region17: #{tpu_custom_call.1} parent=11 // pred_check
          %p222 = pneg %p136
        $region18: #{tpu_custom_call.1} parent=11 // pred_check_branch
          %224 = sbr.rel (%p222) target = $region20
        $region19: #{tpu_custom_call.1} parent=11 // pred_region
          _
        $region20: #{tpu_custom_call.1} parent=11 // pred_fallthru
          _
        // Predicated region
        $region21: #{tpu_custom_call.1} parent=11 // pred_check
          %p225 = pneg %p157
        $region22: #{tpu_custom_call.1} parent=11 // pred_check_branch
          %227 = sbr.rel (%p225) target = $region24
        $region23: #{tpu_custom_call.1} parent=11 // pred_region
          _
        $region24: #{tpu_custom_call.1} parent=11 // pred_fallthru
          _
        // Predicated region
        $region25: #{tpu_custom_call.1} parent=11 // pred_check
          %p228 = pneg %p178
        $region26: #{tpu_custom_call.1} parent=11 // pred_check_branch
          %230 = sbr.rel (%p228) target = $region28
        $region27: #{tpu_custom_call.1} parent=11 // pred_region
          _
        $region28: #{tpu_custom_call.1} parent=11 // pred_fallthru
          _
      $region12: #{tpu_custom_call.1} parent=5 // pred_fallthru
        _
      %p231 = scmp.lt.s32.totalorder %s16, 2
      // Predicated region
      $region29: #{tpu_custom_call.1} parent=5 // pred_check
        %p232 = pneg %p231
      $region30: #{tpu_custom_call.1} parent=5 // pred_check_branch
        %234 = sbr.rel (%p232) target = $region32
      $region31: #{tpu_custom_call.1} parent=5 // pred_region
        // Predicated region
        $region33: #{tpu_custom_call.1} parent=31 // pred_check
          %p235 = pneg %p36
        $region34: #{tpu_custom_call.1} parent=31 // pred_check_branch
          %237 = sbr.rel (%p235) target = $region36
        $region35: #{tpu_custom_call.1} parent=31 // pred_region
          %s238 = smul.u32 8, %s16
          %p239 = scmp.lt.s32.totalorder %s238, 15
          %s240 = scalar_select %p239, %s238, 15
          %s241 = smul.addr %s240, 2
          %s242 = smul.addr %s241, 4
          %s243 = scalar_lea.vmem %s0, %s242
          %s244 = smul.u32 8, %s16
        $region36: #{tpu_custom_call.1} parent=31 // pred_fallthru
          _
        // Predicated region
        $region37: #{tpu_custom_call.1} parent=31 // pred_check
          %p245 = pneg %p62
        $region38: #{tpu_custom_call.1} parent=31 // pred_check_branch
          %247 = sbr.rel (%p245) target = $region40
        $region39: #{tpu_custom_call.1} parent=31 // pred_region
          %s248 = smul.u32 8, %s16
          %p249 = scmp.lt.s32.totalorder %s248, 15
          %s250 = scalar_select %p249, %s248, 15
          %s251 = smul.addr %s250, 3
          %s252 = smul.addr %s251, 4
          %s253 = scalar_lea.vmem %s1, %s252
          %s254 = smul.u32 8, %s16
        $region40: #{tpu_custom_call.1} parent=31 // pred_fallthru
          _
        // Predicated region
        $region41: #{tpu_custom_call.1} parent=31 // pred_check
          %p255 = pneg %p88
        $region42: #{tpu_custom_call.1} parent=31 // pred_check_branch
          %257 = sbr.rel (%p255) target = $region44
        $region43: #{tpu_custom_call.1} parent=31 // pred_region
          %s258 = smul.u32 8, %s16
          %p259 = scmp.lt.s32.totalorder %s258, 15
          %s260 = scalar_select %p259, %s258, 15
          %s261 = smul.addr %s260, 2
          %s262 = smul.addr %s261, 4
          %s263 = scalar_lea.vmem %s2, %s262
          %s264 = smul.u32 8, %s16
        $region44: #{tpu_custom_call.1} parent=31 // pred_fallthru
          _
      $region32: #{tpu_custom_call.1} parent=5 // pred_fallthru
        _
      %p265 = scmp.le.s32.totalorder 1, %s16
      %p266 = scmp.lt.s32.totalorder %s16, 3
      %p267 = pnand %p265, %p266
      %p268 = pneg %p267
      // Predicated region
      $region45: #{tpu_custom_call.1} parent=5 // pred_check
        _
      $region46: #{tpu_custom_call.1} parent=5 // pred_check_branch
        %270 = sbr.rel (%p267) target = $region48
      $region47: #{tpu_custom_call.1} parent=5 // pred_region
        %s271 = ssub.s32 %s16, 1
        %s272 = smul.u32 8, %s21
        %p273 = scmp.lt.s32.totalorder %s272, 15
        %s274 = scalar_select %p273, %s272, 15
        %s275 = smul.addr %s274, 2
        %s276 = smul.addr %s275, 4
        %s277 = scalar_lea.vmem %s0, %s276
        %p278 = pneg %p42
        %p279 = pneg %p39
        %s280 = smul.u32 8, %s21
        %p281 = scmp.lt.s32.totalorder %s280, 15
        %s282 = scalar_select %p281, %s280, 15
        %s283 = smul.addr %s282, 3
        %s284 = smul.addr %s283, 4
        %s285 = scalar_lea.vmem %s1, %s284
        %p286 = pneg %p68
        %p287 = pneg %p65
        %s288 = smul.u32 8, %s21
        %p289 = scmp.lt.s32.totalorder %s288, 15
        %s290 = scalar_select %p289, %s288, 15
        %s291 = smul.addr %s290, 2
        %s292 = smul.addr %s291, 4
        %s293 = scalar_lea.vmem %s2, %s292
        %p294 = pneg %p94
        %p295 = pneg %p91
        %p296 = pneg %p115
        %p297 = pneg %p112
        %p298 = pneg %p136
        %p299 = pneg %p133
        %p300 = pneg %p157
        %p301 = pneg %p154
        %p302 = pneg %p178
        %p303 = pneg %p175
        %p304 = pneg %p204
        %p305 = pneg %p201
        %s306 = sand.u32 %s191, 1
        %s307 = scalar_lea.sflag [#allocation3], %s306
        %s308 = sand.u32 %s191, 1
        %s309 = smul.addr %s308, 8
        %s310 = scalar_lea.vmem [#allocation2], %s309
        %s311 = smul.u32 8, %s21
        %p312 = scmp.lt.s32.totalorder %s311, 15
        %s313 = scalar_select %p312, %s311, 15
        %s314 = smul.addr %s313, 2
        %s315 = smul.addr %s314, 4
        %s316 = scalar_lea.vmem %s0, %s315
        %s317 = smul.u32 8, %s21
        %s318 = smul.u32 8, %s21
        %p319 = scmp.lt.s32.totalorder %s318, 15
        %s320 = scalar_select %p319, %s318, 15
        %s321 = smul.addr %s320, 3
        %s322 = smul.addr %s321, 4
        %s323 = scalar_lea.vmem %s1, %s322
        %s324 = smul.u32 8, %s21
        %s325 = smul.u32 8, %s21
        %p326 = scmp.lt.s32.totalorder %s325, 15
        %s327 = scalar_select %p326, %s325, 15
        %s328 = smul.addr %s327, 2
        %s329 = smul.addr %s328, 4
        %s330 = scalar_lea.vmem %s2, %s329
        %s331 = smul.u32 8, %s21
        %v333 = vld [vmem:[%s4] sm:$0x1]
        %v334 = vld [vmem:[%s316] sm:$0xf]
        %v335 = vld [vmem:[%s316 + $0x4] sm:$0x1]
        %v336 = vld [vmem:[%s316 + $0x8] sm:$0xf]
        %v337 = vld [vmem:[%s316 + $0xc] sm:$0x1]
        %v338 = vld [vmem:[%s316 + $0x10] sm:$0xf]
        %v339 = vld [vmem:[%s316 + $0x14] sm:$0x1]
        %v340 = vld [vmem:[%s316 + $0x18] sm:$0xf]
        %v341 = vld [vmem:[%s316 + $0x1c] sm:$0x1]
        %v342 = vld [vmem:[%s316 + $0x20] sm:$0xf]
        %v343 = vld [vmem:[%s316 + $0x24] sm:$0x1]
        %v344 = vld [vmem:[%s316 + $0x28] sm:$0xf]
        %v345 = vld [vmem:[%s316 + $0x2c] sm:$0x1]
        %v346 = vld [vmem:[%s316 + $0x30] sm:$0xf]
        %v347 = vld [vmem:[%s316 + $0x34] sm:$0x1]
        %v348 = vld [vmem:[%s316 + $0x38] sm:$0xf]
        %v349 = vld [vmem:[%s316 + $0x3c] sm:$0x1]
        %v350 = vld [vmem:[%s3] sm:$0xf]
        %v351 = vld [vmem:[%s3 + $0x4] sm:$0xf]
        %v352 = vld [vmem:[%s3 + $0x8] sm:$0xf]
        %v353 = vld [vmem:[%s3 + $0xc] sm:$0xf]
        %v354 = vld [vmem:[%s3 + $0x10] sm:$0xf]
        %v355 = vld [vmem:[%s3 + $0x14] sm:$0xf]
        %v356 = vld [vmem:[%s3 + $0x18] sm:$0xf]
        %v357 = vld [vmem:[%s3 + $0x1c] sm:$0xf]
        %v358 = vld [vmem:[%s3 + $0x20] sm:$0xf]
        %v359 = vld [vmem:[%s3 + $0x24] sm:$0xf]
        %v360 = vld [vmem:[%s3 + $0x28] sm:$0xf]
        %v361 = vld [vmem:[%s3 + $0x2c] sm:$0xf]
        %v362 = vld [vmem:[%s3 + $0x30] sm:$0xf]
        %v363 = vld [vmem:[%s3 + $0x34] sm:$0xf]
        %v364 = vld [vmem:[%s3 + $0x38] sm:$0xf]
        %v365 = vld [vmem:[%s3 + $0x3c] sm:$0xf]
        %vm366 = vsmask.f32 3328
        %vm367 = vsmask.f32 7440
        %vm368 = vmor %vm366, %vm367
        %v370 = vshrl.u32 %v334, 16
        %v372 = vrot.slane %v370, 4
        %v373 = vshll.u32 %v334, 16
        %v375 = vrot.slane %v373, 5
        %v376 = vor.u32 %v372, %v375
        %v377 = vrot.slane %v376, 4
        %v379 = vshll.u32 %v335, 16
        %v381 = vrot.slane %v379, 5
        %v382 = vsel %vm368, %v377, %v381
        %v384 = vshrl.u32 %v336, 16
        %v386 = vrot.slane %v384, 4
        %v387 = vshll.u32 %v336, 16
        %v389 = vrot.slane %v387, 5
        %v390 = vor.u32 %v386, %v389
        %v391 = vrot.slane %v390, 4
        %v393 = vshll.u32 %v337, 16
        %v395 = vrot.slane %v393, 5
        %v396 = vsel %vm368, %v391, %v395
        %v398 = vshrl.u32 %v338, 16
        %v400 = vrot.slane %v398, 4
        %v401 = vshll.u32 %v338, 16
        %v403 = vrot.slane %v401, 5
        %v404 = vor.u32 %v400, %v403
        %v405 = vrot.slane %v404, 4
        %v407 = vshll.u32 %v339, 16
        %v409 = vrot.slane %v407, 5
        %v410 = vsel %vm368, %v405, %v409
        %v412 = vshrl.u32 %v340, 16
        %v414 = vrot.slane %v412, 4
        %v415 = vshll.u32 %v340, 16
        %v417 = vrot.slane %v415, 5
        %v418 = vor.u32 %v414, %v417
        %v419 = vrot.slane %v418, 4
        %v421 = vshll.u32 %v341, 16
        %v423 = vrot.slane %v421, 5
        %v424 = vsel %vm368, %v419, %v423
        %v426 = vshrl.u32 %v342, 16
        %v428 = vrot.slane %v426, 4
        %v429 = vshll.u32 %v342, 16
        %v431 = vrot.slane %v429, 5
        %v432 = vor.u32 %v428, %v431
        %v433 = vrot.slane %v432, 4
        %v435 = vshll.u32 %v343, 16
        %v437 = vrot.slane %v435, 5
        %v438 = vsel %vm368, %v433, %v437
        %v440 = vshrl.u32 %v344, 16
        %v442 = vrot.slane %v440, 4
        %v443 = vshll.u32 %v344, 16
        %v445 = vrot.slane %v443, 5
        %v446 = vor.u32 %v442, %v445
        %v447 = vrot.slane %v446, 4
        %v449 = vshll.u32 %v345, 16
        %v451 = vrot.slane %v449, 5
        %v452 = vsel %vm368, %v447, %v451
        %v454 = vshrl.u32 %v346, 16
        %v456 = vrot.slane %v454, 4
        %v457 = vshll.u32 %v346, 16
        %v459 = vrot.slane %v457, 5
        %v460 = vor.u32 %v456, %v459
        %v461 = vrot.slane %v460, 4
        %v463 = vshll.u32 %v347, 16
        %v465 = vrot.slane %v463, 5
        %v466 = vsel %vm368, %v461, %v465
        %v468 = vshrl.u32 %v348, 16
        %v470 = vrot.slane %v468, 4
        %v471 = vshll.u32 %v348, 16
        %v473 = vrot.slane %v471, 5
        %v474 = vor.u32 %v470, %v473
        %v475 = vrot.slane %v474, 4
        %v477 = vshll.u32 %v349, 16
        %v479 = vrot.slane %v477, 5
        %v480 = vsel %vm368, %v475, %v479
        %s481 = scalar_lea.vmem %s3, 64
        %v482 = vld [vmem:[%s481] sm:$0xf]
        %v483 = vld [vmem:[%s481 + $0x4] sm:$0xf]
        %v484 = vld [vmem:[%s481 + $0x8] sm:$0xf]
        %v485 = vld [vmem:[%s481 + $0xc] sm:$0xf]
        %v486 = vld [vmem:[%s481 + $0x10] sm:$0xf]
        %v487 = vld [vmem:[%s481 + $0x14] sm:$0xf]
        %v488 = vld [vmem:[%s481 + $0x18] sm:$0xf]
        %v489 = vld [vmem:[%s481 + $0x1c] sm:$0xf]
        %v490 = vld [vmem:[%s481 + $0x20] sm:$0xf]
        %v491 = vld [vmem:[%s481 + $0x24] sm:$0xf]
        %v492 = vld [vmem:[%s481 + $0x28] sm:$0xf]
        %v493 = vld [vmem:[%s481 + $0x2c] sm:$0xf]
        %v494 = vld [vmem:[%s481 + $0x30] sm:$0xf]
        %v495 = vld [vmem:[%s481 + $0x34] sm:$0xf]
        %v496 = vld [vmem:[%s481 + $0x38] sm:$0xf]
        %v497 = vld [vmem:[%s481 + $0x3c] sm:$0xf]
        %v498 = vunpack.c.l.b16 %v382
        %v499 = vunpack.c.l.b16 %v396
        %v500 = vunpack.c.l.b16 %v410
        %v501 = vunpack.c.l.b16 %v424
        %v502 = vunpack.c.l.b16 %v438
        %v503 = vunpack.c.l.b16 %v452
        %v504 = vunpack.c.l.b16 %v466
        %v505 = vunpack.c.l.b16 %v480
        %v506 = vpack.c.b16 %v499, %v498
        %v507 = vpack.c.b16 %v501, %v500
        %v508 = vpack.c.b16 %v503, %v502
        %v509 = vpack.c.b16 %v505, %v504
        %v530 = vunpack.c.l.b16 %v482
        %v531 = vunpack.c.l.b16 %v483
        %v532 = vunpack.c.l.b16 %v484
        %v533 = vunpack.c.l.b16 %v485
        %v534 = vunpack.c.l.b16 %v486
        %v535 = vunpack.c.l.b16 %v487
        %v536 = vunpack.c.l.b16 %v488
        %v537 = vunpack.c.l.b16 %v489
        %v538 = vunpack.c.l.b16 %v490
        %v539 = vunpack.c.l.b16 %v491
        %v540 = vunpack.c.l.b16 %v492
        %v541 = vunpack.c.l.b16 %v493
        %v542 = vunpack.c.l.b16 %v494
        %v543 = vunpack.c.l.b16 %v495
        %v544 = vunpack.c.l.b16 %v496
        %v545 = vunpack.c.l.b16 %v497
        %v546 = vpack.c.b16 %v531, %v530
        %v547 = vpack.c.b16 %v533, %v532
        %v548 = vpack.c.b16 %v535, %v534
        %v549 = vpack.c.b16 %v537, %v536
        %v550 = vpack.c.b16 %v539, %v538
        %v551 = vpack.c.b16 %v541, %v540
        %v552 = vpack.c.b16 %v543, %v542
        %v553 = vpack.c.b16 %v545, %v544
        %562 = vmatprep.subr.bf16.mxu0 0
        %563 = vmatpush1.bf16.msra.mxu0 %v546
        %564 = vmatprep.subr.bf16.mxu0 0
        %565 = vmatpush1.bf16.msra.mxu0 %v547
        %566 = vmatprep.subr.bf16.mxu0 0
        %567 = vmatpush1.bf16.msra.mxu0 %v548
        %568 = vmatprep.subr.bf16.mxu0 0
        %569 = vmatpush1.bf16.msra.mxu0 %v549
        %570 = vmatprep.subr.bf16.mxu0 0
        %571 = vmatpush1.bf16.msra.mxu0 %v550
        %572 = vmatprep.subr.bf16.mxu0 0
        %573 = vmatpush1.bf16.msra.mxu0 %v551
        %574 = vmatprep.subr.bf16.mxu0 0
        %575 = vmatpush1.bf16.msra.mxu0 %v552
        %576 = vmatprep.subr.bf16.mxu0 0
        %577 = vmatpush1.bf16.msra.mxu0 %v553
        %578 = vmatprep.subr.bf16.mxu0 0
        %579 = vmatpush1.bf16.msra.mxu0 0
        %580 = vmatprep.subr.bf16.mxu0 0
        %581 = vmatpush1.bf16.msra.mxu0 0
        %582 = vmatprep.subr.bf16.mxu0 0
        %583 = vmatpush1.bf16.msra.mxu0 0
        %584 = vmatprep.subr.bf16.mxu0 0
        %585 = vmatpush1.bf16.msra.mxu0 0
        %586 = vmatprep.subr.bf16.mxu0 0
        %587 = vmatpush1.bf16.msra.mxu0 0
        %588 = vmatprep.subr.bf16.mxu0 0
        %589 = vmatpush1.bf16.msra.mxu0 0
        %590 = vmatprep.subr.bf16.mxu0 0
        %591 = vmatpush1.bf16.msra.mxu0 0
        %592 = vmatprep.subr.bf16.mxu0 0
        %593 = vmatpush1.bf16.msra.mxu0 0
        %594 = vmatprep.mubr.bf16.mxu0 0
        %595 = vmatmul.mubr.bf16.gmra.mrb[0].mxu0 %v506
        %v596 = vpop.f32.mrb[0].mxu0
        %v597 = vadd.f32 0.0, %v596
        %v598 = vpop.f32.mrb[0].mxu0
        %v599 = vpop.f32.mrb[0].mxu0
        %v600 = vadd.f32 0.0, %v599
        %v601 = vpop.f32.mrb[0].mxu0
        %602 = vmatprep.mubr.bf16.mxu0 0
        %603 = vmatmul.mubr.bf16.gmra.mrb[0].mxu0 %v507
        %v604 = vpop.f32.mrb[0].mxu0
        %v605 = vadd.f32 0.0, %v604
        %v606 = vpop.f32.mrb[0].mxu0
        %v607 = vpop.f32.mrb[0].mxu0
        %v608 = vadd.f32 0.0, %v607
        %v609 = vpop.f32.mrb[0].mxu0
        %610 = vmatprep.mubr.bf16.mxu0 0
        %611 = vmatmul.mubr.bf16.gmra.mrb[0].mxu0 %v508
        %v612 = vpop.f32.mrb[0].mxu0
        %v613 = vadd.f32 0.0, %v612
        %v614 = vpop.f32.mrb[0].mxu0
        %v615 = vpop.f32.mrb[0].mxu0
        %v616 = vadd.f32 0.0, %v615
        %v617 = vpop.f32.mrb[0].mxu0
        %618 = vmatprep.mubr.bf16.mxu0 0
        %619 = vmatmul.mubr.bf16.gmra.mrb[0].mxu0 %v509
        %v620 = vpop.f32.mrb[0].mxu0
        %v621 = vadd.f32 0.0, %v620
        %v622 = vpop.f32.mrb[0].mxu0
        %v623 = vpop.f32.mrb[0].mxu0
        %v624 = vadd.f32 0.0, %v623
        %v625 = vpop.f32.mrb[0].mxu0
        %626 = vdwg.mxu0
        %v635 = vunpack.c.l.b16 %v334
        %v636 = vunpack.c.l.b16 %v336
        %v637 = vunpack.c.l.b16 %v338
        %v638 = vunpack.c.l.b16 %v340
        %v639 = vunpack.c.l.b16 %v342
        %v640 = vunpack.c.l.b16 %v344
        %v641 = vunpack.c.l.b16 %v346
        %v642 = vunpack.c.l.b16 %v348
        %v643 = vpack.c.b16 %v636, %v635
        %v644 = vpack.c.b16 %v638, %v637
        %v645 = vpack.c.b16 %v640, %v639
        %v646 = vpack.c.b16 %v642, %v641
        %v667 = vunpack.c.l.b16 %v350
        %v668 = vunpack.c.l.b16 %v351
        %v669 = vunpack.c.l.b16 %v352
        %v670 = vunpack.c.l.b16 %v353
        %v671 = vunpack.c.l.b16 %v354
        %v672 = vunpack.c.l.b16 %v355
        %v673 = vunpack.c.l.b16 %v356
        %v674 = vunpack.c.l.b16 %v357
        %v675 = vunpack.c.l.b16 %v358
        %v676 = vunpack.c.l.b16 %v359
        %v677 = vunpack.c.l.b16 %v360
        %v678 = vunpack.c.l.b16 %v361
        %v679 = vunpack.c.l.b16 %v362
        %v680 = vunpack.c.l.b16 %v363
        %v681 = vunpack.c.l.b16 %v364
        %v682 = vunpack.c.l.b16 %v365
        %v683 = vpack.c.b16 %v668, %v667
        %v684 = vpack.c.b16 %v670, %v669
        %v685 = vpack.c.b16 %v672, %v671
        %v686 = vpack.c.b16 %v674, %v673
        %v687 = vpack.c.b16 %v676, %v675
        %v688 = vpack.c.b16 %v678, %v677
        %v689 = vpack.c.b16 %v680, %v679
        %v690 = vpack.c.b16 %v682, %v681
        %699 = vmatprep.subr.bf16.mxu0 0
        %700 = vmatpush1.bf16.msra.mxu0 %v683
        %701 = vmatprep.subr.bf16.mxu0 0
        %702 = vmatpush1.bf16.msra.mxu0 %v684
        %703 = vmatprep.subr.bf16.mxu0 0
        %704 = vmatpush1.bf16.msra.mxu0 %v685
        %705 = vmatprep.subr.bf16.mxu0 0
        %706 = vmatpush1.bf16.msra.mxu0 %v686
        %707 = vmatprep.subr.bf16.mxu0 0
        %708 = vmatpush1.bf16.msra.mxu0 %v687
        %709 = vmatprep.subr.bf16.mxu0 0
        %710 = vmatpush1.bf16.msra.mxu0 %v688
        %711 = vmatprep.subr.bf16.mxu0 0
        %712 = vmatpush1.bf16.msra.mxu0 %v689
        %713 = vmatprep.subr.bf16.mxu0 0
        %714 = vmatpush1.bf16.msra.mxu0 %v690
        %715 = vmatprep.subr.bf16.mxu0 0
        %716 = vmatpush1.bf16.msra.mxu0 0
        %717 = vmatprep.subr.bf16.mxu0 0
        %718 = vmatpush1.bf16.msra.mxu0 0
        %719 = vmatprep.subr.bf16.mxu0 0
        %720 = vmatpush1.bf16.msra.mxu0 0
        %721 = vmatprep.subr.bf16.mxu0 0
        %722 = vmatpush1.bf16.msra.mxu0 0
        %723 = vmatprep.subr.bf16.mxu0 0
        %724 = vmatpush1.bf16.msra.mxu0 0
        %725 = vmatprep.subr.bf16.mxu0 0
        %726 = vmatpush1.bf16.msra.mxu0 0
        %727 = vmatprep.subr.bf16.mxu0 0
        %728 = vmatpush1.bf16.msra.mxu0 0
        %729 = vmatprep.subr.bf16.mxu0 0
        %730 = vmatpush1.bf16.msra.mxu0 0
        %731 = vmatprep.mubr.bf16.mxu0 0
        %732 = vmatmul.mubr.bf16.gmra.mrb[0].mxu0 %v643
        %v733 = vpop.f32.mrb[0].mxu0
        %v734 = vadd.f32 %v597, %v733
        %v735 = vpop.f32.mrb[0].mxu0
        %v736 = vpop.f32.mrb[0].mxu0
        %v737 = vadd.f32 %v600, %v736
        %v738 = vpop.f32.mrb[0].mxu0
        %739 = vmatprep.mubr.bf16.mxu0 0
        %740 = vmatmul.mubr.bf16.gmra.mrb[0].mxu0 %v644
        %v741 = vpop.f32.mrb[0].mxu0
        %v742 = vadd.f32 %v605, %v741
        %v743 = vpop.f32.mrb[0].mxu0
        %v744 = vpop.f32.mrb[0].mxu0
        %v745 = vadd.f32 %v608, %v744
        %v746 = vpop.f32.mrb[0].mxu0
        %747 = vmatprep.mubr.bf16.mxu0 0
        %748 = vmatmul.mubr.bf16.gmra.mrb[0].mxu0 %v645
        %v749 = vpop.f32.mrb[0].mxu0
        %v750 = vadd.f32 %v613, %v749
        %v751 = vpop.f32.mrb[0].mxu0
        %v752 = vpop.f32.mrb[0].mxu0
        %v753 = vadd.f32 %v616, %v752
        %v754 = vpop.f32.mrb[0].mxu0
        %755 = vmatprep.mubr.bf16.mxu0 0
        %756 = vmatmul.mubr.bf16.gmra.mrb[0].mxu0 %v646
        %v757 = vpop.f32.mrb[0].mxu0
        %v758 = vadd.f32 %v621, %v757
        %v759 = vpop.f32.mrb[0].mxu0
        %v760 = vpop.f32.mrb[0].mxu0
        %v761 = vadd.f32 %v624, %v760
        %v762 = vpop.f32.mrb[0].mxu0
        %763 = vdwg.mxu0
        %vm772 = vcmask 1042432
        %vm773 = vcmask 1046532
        %vm774 = vmor %vm772, %vm773
        %v775 = vrot.slane %v334, 5
        %v776 = vrot.slane %v775, 4
        %v777 = vrot.slane %v335, 5
        %v778 = vsel %vm774, %v776, %v777
        %v779 = vrot.slane %v336, 5
        %v780 = vrot.slane %v779, 4
        %v781 = vrot.slane %v337, 5
        %v782 = vsel %vm774, %v780, %v781
        %v783 = vrot.slane %v338, 5
        %v784 = vrot.slane %v783, 4
        %v785 = vrot.slane %v339, 5
        %v786 = vsel %vm774, %v784, %v785
        %v787 = vrot.slane %v340, 5
        %v788 = vrot.slane %v787, 4
        %v789 = vrot.slane %v341, 5
        %v790 = vsel %vm774, %v788, %v789
        %v791 = vrot.slane %v342, 5
        %v792 = vrot.slane %v791, 4
        %v793 = vrot.slane %v343, 5
        %v794 = vsel %vm774, %v792, %v793
        %v795 = vrot.slane %v344, 5
        %v796 = vrot.slane %v795, 4
        %v797 = vrot.slane %v345, 5
        %v798 = vsel %vm774, %v796, %v797
        %v799 = vrot.slane %v346, 5
        %v800 = vrot.slane %v799, 4
        %v801 = vrot.slane %v347, 5
        %v802 = vsel %vm774, %v800, %v801
        %v803 = vrot.slane %v348, 5
        %v804 = vrot.slane %v803, 4
        %v805 = vrot.slane %v349, 5
        %v806 = vsel %vm774, %v804, %v805
        %s807 = scalar_lea.vmem %s3, 128
        %v808 = vld [vmem:[%s807] sm:$0xf]
        %v809 = vld [vmem:[%s807 + $0x4] sm:$0xf]
        %v810 = vld [vmem:[%s807 + $0x8] sm:$0xf]
        %v811 = vld [vmem:[%s807 + $0xc] sm:$0xf]
        %v812 = vld [vmem:[%s807 + $0x10] sm:$0xf]
        %v813 = vld [vmem:[%s807 + $0x14] sm:$0xf]
        %v814 = vld [vmem:[%s807 + $0x18] sm:$0xf]
        %v815 = vld [vmem:[%s807 + $0x1c] sm:$0xf]
        %v816 = vld [vmem:[%s807 + $0x20] sm:$0xf]
        %v817 = vld [vmem:[%s807 + $0x24] sm:$0xf]
        %v818 = vld [vmem:[%s807 + $0x28] sm:$0xf]
        %v819 = vld [vmem:[%s807 + $0x2c] sm:$0xf]
        %v820 = vld [vmem:[%s807 + $0x30] sm:$0xf]
        %v821 = vld [vmem:[%s807 + $0x34] sm:$0xf]
        %v822 = vld [vmem:[%s807 + $0x38] sm:$0xf]
        %v823 = vld [vmem:[%s807 + $0x3c] sm:$0xf]
        %v824 = vunpack.c.l.b16 %v778
        %v825 = vunpack.c.l.b16 %v782
        %v826 = vunpack.c.l.b16 %v786
        %v827 = vunpack.c.l.b16 %v790
        %v828 = vunpack.c.l.b16 %v794
        %v829 = vunpack.c.l.b16 %v798
        %v830 = vunpack.c.l.b16 %v802
        %v831 = vunpack.c.l.b16 %v806
        %v832 = vpack.c.b16 %v825, %v824
        %v833 = vpack.c.b16 %v827, %v826
        %v834 = vpack.c.b16 %v829, %v828
        %v835 = vpack.c.b16 %v831, %v830
        %v856 = vunpack.c.l.b16 %v808
        %v857 = vunpack.c.l.b16 %v809
        %v858 = vunpack.c.l.b16 %v810
        %v859 = vunpack.c.l.b16 %v811
        %v860 = vunpack.c.l.b16 %v812
        %v861 = vunpack.c.l.b16 %v813
        %v862 = vunpack.c.l.b16 %v814
        %v863 = vunpack.c.l.b16 %v815
        %v864 = vunpack.c.l.b16 %v816
        %v865 = vunpack.c.l.b16 %v817
        %v866 = vunpack.c.l.b16 %v818
        %v867 = vunpack.c.l.b16 %v819
        %v868 = vunpack.c.l.b16 %v820
        %v869 = vunpack.c.l.b16 %v821
        %v870 = vunpack.c.l.b16 %v822
        %v871 = vunpack.c.l.b16 %v823
        %v872 = vpack.c.b16 %v857, %v856
        %v873 = vpack.c.b16 %v859, %v858
        %v874 = vpack.c.b16 %v861, %v860
        %v875 = vpack.c.b16 %v863, %v862
        %v876 = vpack.c.b16 %v865, %v864
        %v877 = vpack.c.b16 %v867, %v866
        %v878 = vpack.c.b16 %v869, %v868
        %v879 = vpack.c.b16 %v871, %v870
        %888 = vmatprep.subr.bf16.mxu0 0
        %889 = vmatpush1.bf16.msra.mxu0 %v872
        %890 = vmatprep.subr.bf16.mxu0 0
        %891 = vmatpush1.bf16.msra.mxu0 %v873
        %892 = vmatprep.subr.bf16.mxu0 0
        %893 = vmatpush1.bf16.msra.mxu0 %v874
        %894 = vmatprep.subr.bf16.mxu0 0
        %895 = vmatpush1.bf16.msra.mxu0 %v875
        %896 = vmatprep.subr.bf16.mxu0 0
        %897 = vmatpush1.bf16.msra.mxu0 %v876
        %898 = vmatprep.subr.bf16.mxu0 0
        %899 = vmatpush1.bf16.msra.mxu0 %v877
        %900 = vmatprep.subr.bf16.mxu0 0
        %901 = vmatpush1.bf16.msra.mxu0 %v878
        %902 = vmatprep.subr.bf16.mxu0 0
        %903 = vmatpush1.bf16.msra.mxu0 %v879
        %904 = vmatprep.subr.bf16.mxu0 0
        %905 = vmatpush1.bf16.msra.mxu0 0
        %906 = vmatprep.subr.bf16.mxu0 0
        %907 = vmatpush1.bf16.msra.mxu0 0
        %908 = vmatprep.subr.bf16.mxu0 0
        %909 = vmatpush1.bf16.msra.mxu0 0
        %910 = vmatprep.subr.bf16.mxu0 0
        %911 = vmatpush1.bf16.msra.mxu0 0
        %912 = vmatprep.subr.bf16.mxu0 0
        %913 = vmatpush1.bf16.msra.mxu0 0
        %914 = vmatprep.subr.bf16.mxu0 0
        %915 = vmatpush1.bf16.msra.mxu0 0
        %916 = vmatprep.subr.bf16.mxu0 0
        %917 = vmatpush1.bf16.msra.mxu0 0
        %918 = vmatprep.subr.bf16.mxu0 0
        %919 = vmatpush1.bf16.msra.mxu0 0
        %920 = vmatprep.mubr.bf16.mxu0 0
        %921 = vmatmul.mubr.bf16.gmra.mrb[0].mxu0 %v832
        %v922 = vpop.f32.mrb[0].mxu0
        %v923 = vadd.f32 0.0, %v922
        %v924 = vpop.f32.mrb[0].mxu0
        %v925 = vpop.f32.mrb[0].mxu0
        %v926 = vadd.f32 0.0, %v925
        %v927 = vpop.f32.mrb[0].mxu0
        %928 = vmatprep.mubr.bf16.mxu0 0
        %929 = vmatmul.mubr.bf16.gmra.mrb[0].mxu0 %v833
        %v930 = vpop.f32.mrb[0].mxu0
        %v931 = vadd.f32 0.0, %v930
        %v932 = vpop.f32.mrb[0].mxu0
        %v933 = vpop.f32.mrb[0].mxu0
        %v934 = vadd.f32 0.0, %v933
        %v935 = vpop.f32.mrb[0].mxu0
        %936 = vmatprep.mubr.bf16.mxu0 0
        %937 = vmatmul.mubr.bf16.gmra.mrb[0].mxu0 %v834
        %v938 = vpop.f32.mrb[0].mxu0
        %v939 = vadd.f32 0.0, %v938
        %v940 = vpop.f32.mrb[0].mxu0
        %v941 = vpop.f32.mrb[0].mxu0
        %v942 = vadd.f32 0.0, %v941
        %v943 = vpop.f32.mrb[0].mxu0
        %944 = vmatprep.mubr.bf16.mxu0 0
        %945 = vmatmul.mubr.bf16.gmra.mrb[0].mxu0 %v835
        %v946 = vpop.f32.mrb[0].mxu0
        %v947 = vadd.f32 0.0, %v946
        %v948 = vpop.f32.mrb[0].mxu0
        %v949 = vpop.f32.mrb[0].mxu0
        %v950 = vadd.f32 0.0, %v949
        %v951 = vpop.f32.mrb[0].mxu0
        %952 = vdwg.mxu0
        %v953 = vadd.f32 %v734, %v923
        %v954 = vadd.f32 %v737, %v926
        %v955 = vadd.f32 %v742, %v931
        %v956 = vadd.f32 %v745, %v934
        %v957 = vadd.f32 %v750, %v939
        %v958 = vadd.f32 %v753, %v942
        %v959 = vadd.f32 %v758, %v947
        %v960 = vadd.f32 %v761, %v950
        %v961 = vlaneseq
        %v962 = vshrl.u32 %v961, 7
        %vm963 = vcmp.lt.s32.totalorder %v962, 8
        %v964 = vsel %vm963, %v953, -inf
        %v965 = vsel %vm963, %v954, -inf
        %v966 = vsel %vm963, %v955, -inf
        %v967 = vsel %vm963, %v956, -inf
        %v968 = vsel %vm963, %v957, -inf
        %v969 = vsel %vm963, %v958, -inf
        %v970 = vsel %vm963, %v959, -inf
        %v971 = vsel %vm963, %v960, -inf
        %v972 = vrot.slane %v964, 4
        %v973 = vmax.f32 %v964, %v972
        %v974 = vrot.slane %v973, 2
        %v975 = vmax.f32 %v973, %v974
        %v976 = vrot.slane %v975, 1
        %v977 = vmax.f32 %v975, %v976
        %v978 = vrot.slane %v965, 4
        %v979 = vmax.f32 %v965, %v978
        %v980 = vrot.slane %v979, 2
        %v981 = vmax.f32 %v979, %v980
        %v982 = vrot.slane %v981, 1
        %v983 = vmax.f32 %v981, %v982
        %v984 = vrot.slane %v966, 4
        %v985 = vmax.f32 %v966, %v984
        %v986 = vrot.slane %v985, 2
        %v987 = vmax.f32 %v985, %v986
        %v988 = vrot.slane %v987, 1
        %v989 = vmax.f32 %v987, %v988
        %v990 = vrot.slane %v967, 4
        %v991 = vmax.f32 %v967, %v990
        %v992 = vrot.slane %v991, 2
        %v993 = vmax.f32 %v991, %v992
        %v994 = vrot.slane %v993, 1
        %v995 = vmax.f32 %v993, %v994
        %v996 = vrot.slane %v968, 4
        %v997 = vmax.f32 %v968, %v996
        %v998 = vrot.slane %v997, 2
        %v999 = vmax.f32 %v997, %v998
        %v1000 = vrot.slane %v999, 1
        %v1001 = vmax.f32 %v999, %v1000
        %v1002 = vrot.slane %v969, 4
        %v1003 = vmax.f32 %v969, %v1002
        %v1004 = vrot.slane %v1003, 2
        %v1005 = vmax.f32 %v1003, %v1004
        %v1006 = vrot.slane %v1005, 1
        %v1007 = vmax.f32 %v1005, %v1006
        %v1008 = vrot.slane %v970, 4
        %v1009 = vmax.f32 %v970, %v1008
        %v1010 = vrot.slane %v1009, 2
        %v1011 = vmax.f32 %v1009, %v1010
        %v1012 = vrot.slane %v1011, 1
        %v1013 = vmax.f32 %v1011, %v1012
        %v1014 = vrot.slane %v971, 4
        %v1015 = vmax.f32 %v971, %v1014
        %v1016 = vrot.slane %v1015, 2
        %v1017 = vmax.f32 %v1015, %v1016
        %v1018 = vrot.slane %v1017, 1
        %v1019 = vmax.f32 %v1017, %v1018
        %v1021 = vlaneseq
        %v1022 = vshrl.u32 %v1021, 7
        %v1023 = vsub.s32 0, %v1022
        %v1024 = vrot.slane %v333, %v1023
        %v1026 = vadd.f32 %v977, %v1024
        %v1027 = vadd.f32 %v983, %v1024
        %v1028 = vadd.f32 %v989, %v1024
        %v1029 = vadd.f32 %v995, %v1024
        %v1030 = vadd.f32 %v1001, %v1024
        %v1031 = vadd.f32 %v1007, %v1024
        %v1032 = vadd.f32 %v1013, %v1024
        %v1033 = vadd.f32 %v1019, %v1024
        %v1034 = vtanh.pop %v1026
        %v1035 = vtanh.pop %v1027
        %v1036 = vtanh.pop %v1028
        %v1037 = vtanh.pop %v1029
        %v1038 = vtanh.pop %v1030
        %v1039 = vtanh.pop %v1031
        %v1040 = vtanh.pop %v1032
        %v1041 = vtanh.pop %v1033
        %v1042 = vld [vmem:[%s323] sm:$0xf]
        %v1043 = vld [vmem:[%s323 + $0x4] sm:$0xf]
        %v1044 = vld [vmem:[%s323 + $0x8] sm:$0x1]
        %v1045 = vld [vmem:[%s323 + $0xc] sm:$0xf]
        %v1046 = vld [vmem:[%s323 + $0x10] sm:$0xf]
        %v1047 = vld [vmem:[%s323 + $0x14] sm:$0x1]
        %v1048 = vld [vmem:[%s323 + $0x18] sm:$0xf]
        %v1049 = vld [vmem:[%s323 + $0x1c] sm:$0xf]
        %v1050 = vld [vmem:[%s323 + $0x20] sm:$0x1]
        %v1051 = vld [vmem:[%s323 + $0x24] sm:$0xf]
        %v1052 = vld [vmem:[%s323 + $0x28] sm:$0xf]
        %v1053 = vld [vmem:[%s323 + $0x2c] sm:$0x1]
        %v1054 = vld [vmem:[%s323 + $0x30] sm:$0xf]
        %v1055 = vld [vmem:[%s323 + $0x34] sm:$0xf]
        %v1056 = vld [vmem:[%s323 + $0x38] sm:$0x1]
        %v1057 = vld [vmem:[%s323 + $0x3c] sm:$0xf]
        %v1058 = vld [vmem:[%s323 + $0x40] sm:$0xf]
        %v1059 = vld [vmem:[%s323 + $0x44] sm:$0x1]
        %v1060 = vld [vmem:[%s323 + $0x48] sm:$0xf]
        %v1061 = vld [vmem:[%s323 + $0x4c] sm:$0xf]
        %v1062 = vld [vmem:[%s323 + $0x50] sm:$0x1]
        %v1063 = vld [vmem:[%s323 + $0x54] sm:$0xf]
        %v1064 = vld [vmem:[%s323 + $0x58] sm:$0xf]
        %v1065 = vld [vmem:[%s323 + $0x5c] sm:$0x1]
        %v1067 = vshrl.u32 %v1042, 16
        %v1069 = vrot.slane %v1067, 4
        %v1070 = vshll.u32 %v1042, 16
        %v1072 = vrot.slane %v1070, 5
        %v1073 = vor.u32 %v1069, %v1072
        %v1074 = vrot.slane %v1073, 4
        %v1076 = vshll.u32 %v1043, 16
        %v1078 = vrot.slane %v1076, 5
        %v1079 = vsel %vm368, %v1074, %v1078
        %v1080 = vshrl.u32 %v1043, 16
        %v1082 = vrot.slane %v1080, 4
        %v1083 = vor.u32 %v1082, %v1078
        %v1084 = vrot.slane %v1083, 4
        %v1086 = vshll.u32 %v1044, 16
        %v1088 = vrot.slane %v1086, 5
        %v1089 = vsel %vm368, %v1084, %v1088
        %v1091 = vshrl.u32 %v1045, 16
        %v1093 = vrot.slane %v1091, 4
        %v1094 = vshll.u32 %v1045, 16
        %v1096 = vrot.slane %v1094, 5
        %v1097 = vor.u32 %v1093, %v1096
        %v1098 = vrot.slane %v1097, 4
        %v1100 = vshll.u32 %v1046, 16
        %v1102 = vrot.slane %v1100, 5
        %v1103 = vsel %vm368, %v1098, %v1102
        %v1104 = vshrl.u32 %v1046, 16
        %v1106 = vrot.slane %v1104, 4
        %v1107 = vor.u32 %v1106, %v1102
        %v1108 = vrot.slane %v1107, 4
        %v1110 = vshll.u32 %v1047, 16
        %v1112 = vrot.slane %v1110, 5
        %v1113 = vsel %vm368, %v1108, %v1112
        %v1115 = vshrl.u32 %v1048, 16
        %v1117 = vrot.slane %v1115, 4
        %v1118 = vshll.u32 %v1048, 16
        %v1120 = vrot.slane %v1118, 5
        %v1121 = vor.u32 %v1117, %v1120
        %v1122 = vrot.slane %v1121, 4
        %v1124 = vshll.u32 %v1049, 16
        %v1126 = vrot.slane %v1124, 5
        %v1127 = vsel %vm368, %v1122, %v1126
        %v1128 = vshrl.u32 %v1049, 16
        %v1130 = vrot.slane %v1128, 4
        %v1131 = vor.u32 %v1130, %v1126
        %v1132 = vrot.slane %v1131, 4
        %v1134 = vshll.u32 %v1050, 16
        %v1136 = vrot.slane %v1134, 5
        %v1137 = vsel %vm368, %v1132, %v1136
        %v1139 = vshrl.u32 %v1051, 16
        %v1141 = vrot.slane %v1139, 4
        %v1142 = vshll.u32 %v1051, 16
        %v1144 = vrot.slane %v1142, 5
        %v1145 = vor.u32 %v1141, %v1144
        %v1146 = vrot.slane %v1145, 4
        %v1148 = vshll.u32 %v1052, 16
        %v1150 = vrot.slane %v1148, 5
        %v1151 = vsel %vm368, %v1146, %v1150
        %v1152 = vshrl.u32 %v1052, 16
        %v1154 = vrot.slane %v1152, 4
        %v1155 = vor.u32 %v1154, %v1150
        %v1156 = vrot.slane %v1155, 4
        %v1158 = vshll.u32 %v1053, 16
        %v1160 = vrot.slane %v1158, 5
        %v1161 = vsel %vm368, %v1156, %v1160
        %v1163 = vshrl.u32 %v1054, 16
        %v1165 = vrot.slane %v1163, 4
        %v1166 = vshll.u32 %v1054, 16
        %v1168 = vrot.slane %v1166, 5
        %v1169 = vor.u32 %v1165, %v1168
        %v1170 = vrot.slane %v1169, 4
        %v1172 = vshll.u32 %v1055, 16
        %v1174 = vrot.slane %v1172, 5
        %v1175 = vsel %vm368, %v1170, %v1174
        %v1176 = vshrl.u32 %v1055, 16
        %v1178 = vrot.slane %v1176, 4
        %v1179 = vor.u32 %v1178, %v1174
        %v1180 = vrot.slane %v1179, 4
        %v1182 = vshll.u32 %v1056, 16
        %v1184 = vrot.slane %v1182, 5
        %v1185 = vsel %vm368, %v1180, %v1184
        %v1187 = vshrl.u32 %v1057, 16
        %v1189 = vrot.slane %v1187, 4
        %v1190 = vshll.u32 %v1057, 16
        %v1192 = vrot.slane %v1190, 5
        %v1193 = vor.u32 %v1189, %v1192
        %v1194 = vrot.slane %v1193, 4
        %v1196 = vshll.u32 %v1058, 16
        %v1198 = vrot.slane %v1196, 5
        %v1199 = vsel %vm368, %v1194, %v1198
        %v1200 = vshrl.u32 %v1058, 16
        %v1202 = vrot.slane %v1200, 4
        %v1203 = vor.u32 %v1202, %v1198
        %v1204 = vrot.slane %v1203, 4
        %v1206 = vshll.u32 %v1059, 16
        %v1208 = vrot.slane %v1206, 5
        %v1209 = vsel %vm368, %v1204, %v1208
        %v1211 = vshrl.u32 %v1060, 16
        %v1213 = vrot.slane %v1211, 4
        %v1214 = vshll.u32 %v1060, 16
        %v1216 = vrot.slane %v1214, 5
        %v1217 = vor.u32 %v1213, %v1216
        %v1218 = vrot.slane %v1217, 4
        %v1220 = vshll.u32 %v1061, 16
        %v1222 = vrot.slane %v1220, 5
        %v1223 = vsel %vm368, %v1218, %v1222
        %v1224 = vshrl.u32 %v1061, 16
        %v1226 = vrot.slane %v1224, 4
        %v1227 = vor.u32 %v1226, %v1222
        %v1228 = vrot.slane %v1227, 4
        %v1230 = vshll.u32 %v1062, 16
        %v1232 = vrot.slane %v1230, 5
        %v1233 = vsel %vm368, %v1228, %v1232
        %v1235 = vshrl.u32 %v1063, 16
        %v1237 = vrot.slane %v1235, 4
        %v1238 = vshll.u32 %v1063, 16
        %v1240 = vrot.slane %v1238, 5
        %v1241 = vor.u32 %v1237, %v1240
        %v1242 = vrot.slane %v1241, 4
        %v1244 = vshll.u32 %v1064, 16
        %v1246 = vrot.slane %v1244, 5
        %v1247 = vsel %vm368, %v1242, %v1246
        %v1248 = vshrl.u32 %v1064, 16
        %v1250 = vrot.slane %v1248, 4
        %v1251 = vor.u32 %v1250, %v1246
        %v1252 = vrot.slane %v1251, 4
        %v1254 = vshll.u32 %v1065, 16
        %v1256 = vrot.slane %v1254, 5
        %v1257 = vsel %vm368, %v1252, %v1256
        %v1258 = vunpack.c.l.b16 %v1079
        %v1259 = vunpack.c.l.b16 %v1089
        %v1260 = vunpack.c.l.b16 %v1103
        %v1261 = vunpack.c.l.b16 %v1113
        %v1262 = vunpack.c.l.b16 %v1127
        %v1263 = vunpack.c.l.b16 %v1137
        %v1264 = vunpack.c.l.b16 %v1151
        %v1265 = vunpack.c.l.b16 %v1161
        %v1266 = vunpack.c.l.b16 %v1175
        %v1267 = vunpack.c.l.b16 %v1185
        %v1268 = vunpack.c.l.b16 %v1199
        %v1269 = vunpack.c.l.b16 %v1209
        %v1270 = vunpack.c.l.b16 %v1223
        %v1271 = vunpack.c.l.b16 %v1233
        %v1272 = vunpack.c.l.b16 %v1247
        %v1273 = vunpack.c.l.b16 %v1257
        %v1274 = vpack.c.b16 %v1259, %v1258
        %v1275 = vpack.c.b16 %v1261, %v1260
        %v1276 = vpack.c.b16 %v1263, %v1262
        %v1277 = vpack.c.b16 %v1265, %v1264
        %v1278 = vpack.c.b16 %v1267, %v1266
        %v1279 = vpack.c.b16 %v1269, %v1268
        %v1280 = vpack.c.b16 %v1271, %v1270
        %v1281 = vpack.c.b16 %v1273, %v1272
        %1290 = vmatprep.subr.bf16.mxu0 0
        %1291 = vmatpush1.bf16.msra.mxu0 %v546
        %1292 = vmatprep.subr.bf16.mxu0 0
        %1293 = vmatpush1.bf16.msra.mxu0 %v547
        %1294 = vmatprep.subr.bf16.mxu0 0
        %1295 = vmatpush1.bf16.msra.mxu0 %v548
        %1296 = vmatprep.subr.bf16.mxu0 0
        %1297 = vmatpush1.bf16.msra.mxu0 %v549
        %1298 = vmatprep.subr.bf16.mxu0 0
        %1299 = vmatpush1.bf16.msra.mxu0 %v550
        %1300 = vmatprep.subr.bf16.mxu0 0
        %1301 = vmatpush1.bf16.msra.mxu0 %v551
        %1302 = vmatprep.subr.bf16.mxu0 0
        %1303 = vmatpush1.bf16.msra.mxu0 %v552
        %1304 = vmatprep.subr.bf16.mxu0 0
        %1305 = vmatpush1.bf16.msra.mxu0 %v553
        %1306 = vmatprep.subr.bf16.mxu0 0
        %1307 = vmatpush1.bf16.msra.mxu0 0
        %1308 = vmatprep.subr.bf16.mxu0 0
        %1309 = vmatpush1.bf16.msra.mxu0 0
        %1310 = vmatprep.subr.bf16.mxu0 0
        %1311 = vmatpush1.bf16.msra.mxu0 0
        %1312 = vmatprep.subr.bf16.mxu0 0
        %1313 = vmatpush1.bf16.msra.mxu0 0
        %1314 = vmatprep.subr.bf16.mxu0 0
        %1315 = vmatpush1.bf16.msra.mxu0 0
        %1316 = vmatprep.subr.bf16.mxu0 0
        %1317 = vmatpush1.bf16.msra.mxu0 0
        %1318 = vmatprep.subr.bf16.mxu0 0
        %1319 = vmatpush1.bf16.msra.mxu0 0
        %1320 = vmatprep.subr.bf16.mxu0 0
        %1321 = vmatpush1.bf16.msra.mxu0 0
        %1322 = vmatprep.mubr.bf16.mxu0 0
        %1323 = vmatmul.mubr.bf16.gmra.mrb[0].mxu0 %v1274
        %v1324 = vpop.f32.mrb[0].mxu0
        %v1325 = vadd.f32 0.0, %v1324
        %v1326 = vpop.f32.mrb[0].mxu0
        %v1327 = vpop.f32.mrb[0].mxu0
        %v1328 = vadd.f32 0.0, %v1327
        %v1329 = vpop.f32.mrb[0].mxu0
        %1330 = vmatprep.mubr.bf16.mxu0 0
        %1331 = vmatmul.mubr.bf16.gmra.mrb[0].mxu0 %v1275
        %v1332 = vpop.f32.mrb[0].mxu0
        %v1333 = vadd.f32 0.0, %v1332
        %v1334 = vpop.f32.mrb[0].mxu0
        %v1335 = vpop.f32.mrb[0].mxu0
        %v1336 = vadd.f32 0.0, %v1335
        %v1337 = vpop.f32.mrb[0].mxu0
        %1338 = vmatprep.mubr.bf16.mxu0 0
        %1339 = vmatmul.mubr.bf16.gmra.mrb[0].mxu0 %v1276
        %v1340 = vpop.f32.mrb[0].mxu0
        %v1341 = vadd.f32 0.0, %v1340
        %v1342 = vpop.f32.mrb[0].mxu0
        %v1343 = vpop.f32.mrb[0].mxu0
        %v1344 = vadd.f32 0.0, %v1343
        %v1345 = vpop.f32.mrb[0].mxu0
        %1346 = vmatprep.mubr.bf16.mxu0 0
        %1347 = vmatmul.mubr.bf16.gmra.mrb[0].mxu0 %v1277
        %v1348 = vpop.f32.mrb[0].mxu0
        %v1349 = vadd.f32 0.0, %v1348
        %v1350 = vpop.f32.mrb[0].mxu0
        %v1351 = vpop.f32.mrb[0].mxu0
        %v1352 = vadd.f32 0.0, %v1351
        %v1353 = vpop.f32.mrb[0].mxu0
        %1354 = vmatprep.mubr.bf16.mxu0 0
        %1355 = vmatmul.mubr.bf16.gmra.mrb[0].mxu0 %v1278
        %v1356 = vpop.f32.mrb[0].mxu0
        %v1357 = vadd.f32 0.0, %v1356
        %v1358 = vpop.f32.mrb[0].mxu0
        %v1359 = vpop.f32.mrb[0].mxu0
        %v1360 = vadd.f32 0.0, %v1359
        %v1361 = vpop.f32.mrb[0].mxu0
        %1362 = vmatprep.mubr.bf16.mxu0 0
        %1363 = vmatmul.mubr.bf16.gmra.mrb[0].mxu0 %v1279
        %v1364 = vpop.f32.mrb[0].mxu0
        %v1365 = vadd.f32 0.0, %v1364
        %v1366 = vpop.f32.mrb[0].mxu0
        %v1367 = vpop.f32.mrb[0].mxu0
        %v1368 = vadd.f32 0.0, %v1367
        %v1369 = vpop.f32.mrb[0].mxu0
        %1370 = vmatprep.mubr.bf16.mxu0 0
        %1371 = vmatmul.mubr.bf16.gmra.mrb[0].mxu0 %v1280
        %v1372 = vpop.f32.mrb[0].mxu0
        %v1373 = vadd.f32 0.0, %v1372
        %v1374 = vpop.f32.mrb[0].mxu0
        %v1375 = vpop.f32.mrb[0].mxu0
        %v1376 = vadd.f32 0.0, %v1375
        %v1377 = vpop.f32.mrb[0].mxu0
        %1378 = vmatprep.mubr.bf16.mxu0 0
        %1379 = vmatmul.mubr.bf16.gmra.mrb[0].mxu0 %v1281
        %v1380 = vpop.f32.mrb[0].mxu0
        %v1381 = vadd.f32 0.0, %v1380
        %v1382 = vpop.f32.mrb[0].mxu0
        %v1383 = vpop.f32.mrb[0].mxu0
        %v1384 = vadd.f32 0.0, %v1383
        %v1385 = vpop.f32.mrb[0].mxu0
        %1386 = vdwg.mxu0
        %v1403 = vunpack.c.l.b16 %v1042
        %v1404 = vunpack.c.l.b16 %v1043
        %v1405 = vunpack.c.l.b16 %v1045
        %v1406 = vunpack.c.l.b16 %v1046
        %v1407 = vunpack.c.l.b16 %v1048
        %v1408 = vunpack.c.l.b16 %v1049
        %v1409 = vunpack.c.l.b16 %v1051
        %v1410 = vunpack.c.l.b16 %v1052
        %v1411 = vunpack.c.l.b16 %v1054
        %v1412 = vunpack.c.l.b16 %v1055
        %v1413 = vunpack.c.l.b16 %v1057
        %v1414 = vunpack.c.l.b16 %v1058
        %v1415 = vunpack.c.l.b16 %v1060
        %v1416 = vunpack.c.l.b16 %v1061
        %v1417 = vunpack.c.l.b16 %v1063
        %v1418 = vunpack.c.l.b16 %v1064
        %v1419 = vpack.c.b16 %v1404, %v1403
        %v1420 = vpack.c.b16 %v1406, %v1405
        %v1421 = vpack.c.b16 %v1408, %v1407
        %v1422 = vpack.c.b16 %v1410, %v1409
        %v1423 = vpack.c.b16 %v1412, %v1411
        %v1424 = vpack.c.b16 %v1414, %v1413
        %v1425 = vpack.c.b16 %v1416, %v1415
        %v1426 = vpack.c.b16 %v1418, %v1417
        %1435 = vmatprep.subr.bf16.mxu0 0
        %1436 = vmatpush1.bf16.msra.mxu0 %v683
        %1437 = vmatprep.subr.bf16.mxu0 0
        %1438 = vmatpush1.bf16.msra.mxu0 %v684
        %1439 = vmatprep.subr.bf16.mxu0 0
        %1440 = vmatpush1.bf16.msra.mxu0 %v685
        %1441 = vmatprep.subr.bf16.mxu0 0
        %1442 = vmatpush1.bf16.msra.mxu0 %v686
        %1443 = vmatprep.subr.bf16.mxu0 0
        %1444 = vmatpush1.bf16.msra.mxu0 %v687
        %1445 = vmatprep.subr.bf16.mxu0 0
        %1446 = vmatpush1.bf16.msra.mxu0 %v688
        %1447 = vmatprep.subr.bf16.mxu0 0
        %1448 = vmatpush1.bf16.msra.mxu0 %v689
        %1449 = vmatprep.subr.bf16.mxu0 0
        %1450 = vmatpush1.bf16.msra.mxu0 %v690
        %1451 = vmatprep.subr.bf16.mxu0 0
        %1452 = vmatpush1.bf16.msra.mxu0 0
        %1453 = vmatprep.subr.bf16.mxu0 0
        %1454 = vmatpush1.bf16.msra.mxu0 0
        %1455 = vmatprep.subr.bf16.mxu0 0
        %1456 = vmatpush1.bf16.msra.mxu0 0
        %1457 = vmatprep.subr.bf16.mxu0 0
        %1458 = vmatpush1.bf16.msra.mxu0 0
        %1459 = vmatprep.subr.bf16.mxu0 0
        %1460 = vmatpush1.bf16.msra.mxu0 0
        %1461 = vmatprep.subr.bf16.mxu0 0
        %1462 = vmatpush1.bf16.msra.mxu0 0
        %1463 = vmatprep.subr.bf16.mxu0 0
        %1464 = vmatpush1.bf16.msra.mxu0 0
        %1465 = vmatprep.subr.bf16.mxu0 0
        %1466 = vmatpush1.bf16.msra.mxu0 0
        %1467 = vmatprep.mubr.bf16.mxu0 0
        %1468 = vmatmul.mubr.bf16.gmra.mrb[0].mxu0 %v1419
        %v1469 = vpop.f32.mrb[0].mxu0
        %v1470 = vadd.f32 %v1325, %v1469
        %v1471 = vpop.f32.mrb[0].mxu0
        %v1472 = vpop.f32.mrb[0].mxu0
        %v1473 = vadd.f32 %v1328, %v1472
        %v1474 = vpop.f32.mrb[0].mxu0
        %1475 = vmatprep.mubr.bf16.mxu0 0
        %1476 = vmatmul.mubr.bf16.gmra.mrb[0].mxu0 %v1420
        %v1477 = vpop.f32.mrb[0].mxu0
        %v1478 = vadd.f32 %v1333, %v1477
        %v1479 = vpop.f32.mrb[0].mxu0
        %v1480 = vpop.f32.mrb[0].mxu0
        %v1481 = vadd.f32 %v1336, %v1480
        %v1482 = vpop.f32.mrb[0].mxu0
        %1483 = vmatprep.mubr.bf16.mxu0 0
        %1484 = vmatmul.mubr.bf16.gmra.mrb[0].mxu0 %v1421
        %v1485 = vpop.f32.mrb[0].mxu0
        %v1486 = vadd.f32 %v1341, %v1485
        %v1487 = vpop.f32.mrb[0].mxu0
        %v1488 = vpop.f32.mrb[0].mxu0
        %v1489 = vadd.f32 %v1344, %v1488
        %v1490 = vpop.f32.mrb[0].mxu0
        %1491 = vmatprep.mubr.bf16.mxu0 0
        %1492 = vmatmul.mubr.bf16.gmra.mrb[0].mxu0 %v1422
        %v1493 = vpop.f32.mrb[0].mxu0
        %v1494 = vadd.f32 %v1349, %v1493
        %v1495 = vpop.f32.mrb[0].mxu0
        %v1496 = vpop.f32.mrb[0].mxu0
        %v1497 = vadd.f32 %v1352, %v1496
        %v1498 = vpop.f32.mrb[0].mxu0
        %1499 = vmatprep.mubr.bf16.mxu0 0
        %1500 = vmatmul.mubr.bf16.gmra.mrb[0].mxu0 %v1423
        %v1501 = vpop.f32.mrb[0].mxu0
        %v1502 = vadd.f32 %v1357, %v1501
        %v1503 = vpop.f32.mrb[0].mxu0
        %v1504 = vpop.f32.mrb[0].mxu0
        %v1505 = vadd.f32 %v1360, %v1504
        %v1506 = vpop.f32.mrb[0].mxu0
        %1507 = vmatprep.mubr.bf16.mxu0 0
        %1508 = vmatmul.mubr.bf16.gmra.mrb[0].mxu0 %v1424
        %v1509 = vpop.f32.mrb[0].mxu0
        %v1510 = vadd.f32 %v1365, %v1509
        %v1511 = vpop.f32.mrb[0].mxu0
        %v1512 = vpop.f32.mrb[0].mxu0
        %v1513 = vadd.f32 %v1368, %v1512
        %v1514 = vpop.f32.mrb[0].mxu0
        %1515 = vmatprep.mubr.bf16.mxu0 0
        %1516 = vmatmul.mubr.bf16.gmra.mrb[0].mxu0 %v1425
        %v1517 = vpop.f32.mrb[0].mxu0
        %v1518 = vadd.f32 %v1373, %v1517
        %v1519 = vpop.f32.mrb[0].mxu0
        %v1520 = vpop.f32.mrb[0].mxu0
        %v1521 = vadd.f32 %v1376, %v1520
        %v1522 = vpop.f32.mrb[0].mxu0
        %1523 = vmatprep.mubr.bf16.mxu0 0
        %1524 = vmatmul.mubr.bf16.gmra.mrb[0].mxu0 %v1426
        %v1525 = vpop.f32.mrb[0].mxu0
        %v1526 = vadd.f32 %v1381, %v1525
        %v1527 = vpop.f32.mrb[0].mxu0
        %v1528 = vpop.f32.mrb[0].mxu0
        %v1529 = vadd.f32 %v1384, %v1528
        %v1530 = vpop.f32.mrb[0].mxu0
        %1531 = vdwg.mxu0
        %v1540 = vrot.slane %v1042, 5
        %v1541 = vrot.slane %v1540, 4
        %v1542 = vrot.slane %v1043, 5
        %v1543 = vsel %vm774, %v1541, %v1542
        %v1544 = vrot.slane %v1542, 4
        %v1545 = vrot.slane %v1044, 5
        %v1546 = vsel %vm774, %v1544, %v1545
        %v1547 = vrot.slane %v1045, 5
        %v1548 = vrot.slane %v1547, 4
        %v1549 = vrot.slane %v1046, 5
        %v1550 = vsel %vm774, %v1548, %v1549
        %v1551 = vrot.slane %v1549, 4
        %v1552 = vrot.slane %v1047, 5
        %v1553 = vsel %vm774, %v1551, %v1552
        %v1554 = vrot.slane %v1048, 5
        %v1555 = vrot.slane %v1554, 4
        %v1556 = vrot.slane %v1049, 5
        %v1557 = vsel %vm774, %v1555, %v1556
        %v1558 = vrot.slane %v1556, 4
        %v1559 = vrot.slane %v1050, 5
        %v1560 = vsel %vm774, %v1558, %v1559
        %v1561 = vrot.slane %v1051, 5
        %v1562 = vrot.slane %v1561, 4
        %v1563 = vrot.slane %v1052, 5
        %v1564 = vsel %vm774, %v1562, %v1563
        %v1565 = vrot.slane %v1563, 4
        %v1566 = vrot.slane %v1053, 5
        %v1567 = vsel %vm774, %v1565, %v1566
        %v1568 = vrot.slane %v1054, 5
        %v1569 = vrot.slane %v1568, 4
        %v1570 = vrot.slane %v1055, 5
        %v1571 = vsel %vm774, %v1569, %v1570
        %v1572 = vrot.slane %v1570, 4
        %v1573 = vrot.slane %v1056, 5
        %v1574 = vsel %vm774, %v1572, %v1573
        %v1575 = vrot.slane %v1057, 5
        %v1576 = vrot.slane %v1575, 4
        %v1577 = vrot.slane %v1058, 5
        %v1578 = vsel %vm774, %v1576, %v1577
        %v1579 = vrot.slane %v1577, 4
        %v1580 = vrot.slane %v1059, 5
        %v1581 = vsel %vm774, %v1579, %v1580
        %v1582 = vrot.slane %v1060, 5
        %v1583 = vrot.slane %v1582, 4
        %v1584 = vrot.slane %v1061, 5
        %v1585 = vsel %vm774, %v1583, %v1584
        %v1586 = vrot.slane %v1584, 4
        %v1587 = vrot.slane %v1062, 5
        %v1588 = vsel %vm774, %v1586, %v1587
        %v1589 = vrot.slane %v1063, 5
        %v1590 = vrot.slane %v1589, 4
        %v1591 = vrot.slane %v1064, 5
        %v1592 = vsel %vm774, %v1590, %v1591
        %v1593 = vrot.slane %v1591, 4
        %v1594 = vrot.slane %v1065, 5
        %v1595 = vsel %vm774, %v1593, %v1594
        %v1596 = vunpack.c.l.b16 %v1543
        %v1597 = vunpack.c.l.b16 %v1546
        %v1598 = vunpack.c.l.b16 %v1550
        %v1599 = vunpack.c.l.b16 %v1553
        %v1600 = vunpack.c.l.b16 %v1557
        %v1601 = vunpack.c.l.b16 %v1560
        %v1602 = vunpack.c.l.b16 %v1564
        %v1603 = vunpack.c.l.b16 %v1567
        %v1604 = vunpack.c.l.b16 %v1571
        %v1605 = vunpack.c.l.b16 %v1574
        %v1606 = vunpack.c.l.b16 %v1578
        %v1607 = vunpack.c.l.b16 %v1581
        %v1608 = vunpack.c.l.b16 %v1585
        %v1609 = vunpack.c.l.b16 %v1588
        %v1610 = vunpack.c.l.b16 %v1592
        %v1611 = vunpack.c.l.b16 %v1595
        %v1612 = vpack.c.b16 %v1597, %v1596
        %v1613 = vpack.c.b16 %v1599, %v1598
        %v1614 = vpack.c.b16 %v1601, %v1600
        %v1615 = vpack.c.b16 %v1603, %v1602
        %v1616 = vpack.c.b16 %v1605, %v1604
        %v1617 = vpack.c.b16 %v1607, %v1606
        %v1618 = vpack.c.b16 %v1609, %v1608
        %v1619 = vpack.c.b16 %v1611, %v1610
        %1628 = vmatprep.subr.bf16.mxu0 0
        %1629 = vmatpush1.bf16.msra.mxu0 %v872
        %1630 = vmatprep.subr.bf16.mxu0 0
        %1631 = vmatpush1.bf16.msra.mxu0 %v873
        %1632 = vmatprep.subr.bf16.mxu0 0
        %1633 = vmatpush1.bf16.msra.mxu0 %v874
        %1634 = vmatprep.subr.bf16.mxu0 0
        %1635 = vmatpush1.bf16.msra.mxu0 %v875
        %1636 = vmatprep.subr.bf16.mxu0 0
        %1637 = vmatpush1.bf16.msra.mxu0 %v876
        %1638 = vmatprep.subr.bf16.mxu0 0
        %1639 = vmatpush1.bf16.msra.mxu0 %v877
        %1640 = vmatprep.subr.bf16.mxu0 0
        %1641 = vmatpush1.bf16.msra.mxu0 %v878
        %1642 = vmatprep.subr.bf16.mxu0 0
        %1643 = vmatpush1.bf16.msra.mxu0 %v879
        %1644 = vmatprep.subr.bf16.mxu0 0
        %1645 = vmatpush1.bf16.msra.mxu0 0
        %1646 = vmatprep.subr.bf16.mxu0 0
        %1647 = vmatpush1.bf16.msra.mxu0 0
        %1648 = vmatprep.subr.bf16.mxu0 0
        %1649 = vmatpush1.bf16.msra.mxu0 0
        %1650 = vmatprep.subr.bf16.mxu0 0
        %1651 = vmatpush1.bf16.msra.mxu0 0
        %1652 = vmatprep.subr.bf16.mxu0 0
        %1653 = vmatpush1.bf16.msra.mxu0 0
        %1654 = vmatprep.subr.bf16.mxu0 0
        %1655 = vmatpush1.bf16.msra.mxu0 0
        %1656 = vmatprep.subr.bf16.mxu0 0
        %1657 = vmatpush1.bf16.msra.mxu0 0
        %1658 = vmatprep.subr.bf16.mxu0 0
        %1659 = vmatpush1.bf16.msra.mxu0 0
        %1660 = vmatprep.mubr.bf16.mxu0 0
        %1661 = vmatmul.mubr.bf16.gmra.mrb[0].mxu0 %v1612
        %v1662 = vpop.f32.mrb[0].mxu0
        %v1663 = vadd.f32 0.0, %v1662
        %v1664 = vpop.f32.mrb[0].mxu0
        %v1665 = vpop.f32.mrb[0].mxu0
        %v1666 = vadd.f32 0.0, %v1665
        %v1667 = vpop.f32.mrb[0].mxu0
        %1668 = vmatprep.mubr.bf16.mxu0 0
        %1669 = vmatmul.mubr.bf16.gmra.mrb[0].mxu0 %v1613
        %v1670 = vpop.f32.mrb[0].mxu0
        %v1671 = vadd.f32 0.0, %v1670
        %v1672 = vpop.f32.mrb[0].mxu0
        %v1673 = vpop.f32.mrb[0].mxu0
        %v1674 = vadd.f32 0.0, %v1673
        %v1675 = vpop.f32.mrb[0].mxu0
        %1676 = vmatprep.mubr.bf16.mxu0 0
        %1677 = vmatmul.mubr.bf16.gmra.mrb[0].mxu0 %v1614
        %v1678 = vpop.f32.mrb[0].mxu0
        %v1679 = vadd.f32 0.0, %v1678
        %v1680 = vpop.f32.mrb[0].mxu0
        %v1681 = vpop.f32.mrb[0].mxu0
        %v1682 = vadd.f32 0.0, %v1681
        %v1683 = vpop.f32.mrb[0].mxu0
        %1684 = vmatprep.mubr.bf16.mxu0 0
        %1685 = vmatmul.mubr.bf16.gmra.mrb[0].mxu0 %v1615
        %v1686 = vpop.f32.mrb[0].mxu0
        %v1687 = vadd.f32 0.0, %v1686
        %v1688 = vpop.f32.mrb[0].mxu0
        %v1689 = vpop.f32.mrb[0].mxu0
        %v1690 = vadd.f32 0.0, %v1689
        %v1691 = vpop.f32.mrb[0].mxu0
        %1692 = vmatprep.mubr.bf16.mxu0 0
        %1693 = vmatmul.mubr.bf16.gmra.mrb[0].mxu0 %v1616
        %v1694 = vpop.f32.mrb[0].mxu0
        %v1695 = vadd.f32 0.0, %v1694
        %v1696 = vpop.f32.mrb[0].mxu0
        %v1697 = vpop.f32.mrb[0].mxu0
        %v1698 = vadd.f32 0.0, %v1697
        %v1699 = vpop.f32.mrb[0].mxu0
        %1700 = vmatprep.mubr.bf16.mxu0 0
        %1701 = vmatmul.mubr.bf16.gmra.mrb[0].mxu0 %v1617
        %v1702 = vpop.f32.mrb[0].mxu0
        %v1703 = vadd.f32 0.0, %v1702
        %v1704 = vpop.f32.mrb[0].mxu0
        %v1705 = vpop.f32.mrb[0].mxu0
        %v1706 = vadd.f32 0.0, %v1705
        %v1707 = vpop.f32.mrb[0].mxu0
        %1708 = vmatprep.mubr.bf16.mxu0 0
        %1709 = vmatmul.mubr.bf16.gmra.mrb[0].mxu0 %v1618
        %v1710 = vpop.f32.mrb[0].mxu0
        %v1711 = vadd.f32 0.0, %v1710
        %v1712 = vpop.f32.mrb[0].mxu0
        %v1713 = vpop.f32.mrb[0].mxu0
        %v1714 = vadd.f32 0.0, %v1713
        %v1715 = vpop.f32.mrb[0].mxu0
        %1716 = vmatprep.mubr.bf16.mxu0 0
        %1717 = vmatmul.mubr.bf16.gmra.mrb[0].mxu0 %v1619
        %v1718 = vpop.f32.mrb[0].mxu0
        %v1719 = vadd.f32 0.0, %v1718
        %v1720 = vpop.f32.mrb[0].mxu0
        %v1721 = vpop.f32.mrb[0].mxu0
        %v1722 = vadd.f32 0.0, %v1721
        %v1723 = vpop.f32.mrb[0].mxu0
        %1724 = vdwg.mxu0
        %v1725 = vadd.f32 %v1470, %v1663
        %v1726 = vadd.f32 %v1473, %v1666
        %v1727 = vadd.f32 %v1478, %v1671
        %v1728 = vadd.f32 %v1481, %v1674
        %v1729 = vadd.f32 %v1486, %v1679
        %v1730 = vadd.f32 %v1489, %v1682
        %v1731 = vadd.f32 %v1494, %v1687
        %v1732 = vadd.f32 %v1497, %v1690
        %v1733 = vadd.f32 %v1502, %v1695
        %v1734 = vadd.f32 %v1505, %v1698
        %v1735 = vadd.f32 %v1510, %v1703
        %v1736 = vadd.f32 %v1513, %v1706
        %v1737 = vadd.f32 %v1518, %v1711
        %v1738 = vadd.f32 %v1521, %v1714
        %v1739 = vadd.f32 %v1526, %v1719
        %v1740 = vadd.f32 %v1529, %v1722
        %v1741 = vadd.s32 %v962, 8
        %vm1742 = vcmp.lt.s32.totalorder %v962, 10
        %vm1743 = vcmp.lt.s32.totalorder %v1741, 10
        %v1744 = vsel %vm1742, %v1725, -inf
        %v1745 = vsel %vm1743, %v1726, -inf
        %v1746 = vsel %vm1742, %v1727, -inf
        %v1747 = vsel %vm1743, %v1728, -inf
        %v1748 = vsel %vm1742, %v1729, -inf
        %v1749 = vsel %vm1743, %v1730, -inf
        %v1750 = vsel %vm1742, %v1731, -inf
        %v1751 = vsel %vm1743, %v1732, -inf
        %v1752 = vsel %vm1742, %v1733, -inf
        %v1753 = vsel %vm1743, %v1734, -inf
        %v1754 = vsel %vm1742, %v1735, -inf
        %v1755 = vsel %vm1743, %v1736, -inf
        %v1756 = vsel %vm1742, %v1737, -inf
        %v1757 = vsel %vm1743, %v1738, -inf
        %v1758 = vsel %vm1742, %v1739, -inf
        %v1759 = vsel %vm1743, %v1740, -inf
        %v1760 = vmax.f32 %v1744, %v1745
        %v1761 = vrot.slane %v1760, 4
        %v1762 = vmax.f32 %v1760, %v1761
        %v1763 = vrot.slane %v1762, 2
        %v1764 = vmax.f32 %v1762, %v1763
        %v1765 = vrot.slane %v1764, 1
        %v1766 = vmax.f32 %v1764, %v1765
        %v1767 = vmax.f32 %v1746, %v1747
        %v1768 = vrot.slane %v1767, 4
        %v1769 = vmax.f32 %v1767, %v1768
        %v1770 = vrot.slane %v1769, 2
        %v1771 = vmax.f32 %v1769, %v1770
        %v1772 = vrot.slane %v1771, 1
        %v1773 = vmax.f32 %v1771, %v1772
        %v1774 = vmax.f32 %v1748, %v1749
        %v1775 = vrot.slane %v1774, 4
        %v1776 = vmax.f32 %v1774, %v1775
        %v1777 = vrot.slane %v1776, 2
        %v1778 = vmax.f32 %v1776, %v1777
        %v1779 = vrot.slane %v1778, 1
        %v1780 = vmax.f32 %v1778, %v1779
        %v1781 = vmax.f32 %v1750, %v1751
        %v1782 = vrot.slane %v1781, 4
        %v1783 = vmax.f32 %v1781, %v1782
        %v1784 = vrot.slane %v1783, 2
        %v1785 = vmax.f32 %v1783, %v1784
        %v1786 = vrot.slane %v1785, 1
        %v1787 = vmax.f32 %v1785, %v1786
        %v1788 = vmax.f32 %v1752, %v1753
        %v1789 = vrot.slane %v1788, 4
        %v1790 = vmax.f32 %v1788, %v1789
        %v1791 = vrot.slane %v1790, 2
        %v1792 = vmax.f32 %v1790, %v1791
        %v1793 = vrot.slane %v1792, 1
        %v1794 = vmax.f32 %v1792, %v1793
        %v1795 = vmax.f32 %v1754, %v1755
        %v1796 = vrot.slane %v1795, 4
        %v1797 = vmax.f32 %v1795, %v1796
        %v1798 = vrot.slane %v1797, 2
        %v1799 = vmax.f32 %v1797, %v1798
        %v1800 = vrot.slane %v1799, 1
        %v1801 = vmax.f32 %v1799, %v1800
        %v1802 = vmax.f32 %v1756, %v1757
        %v1803 = vrot.slane %v1802, 4
        %v1804 = vmax.f32 %v1802, %v1803
        %v1805 = vrot.slane %v1804, 2
        %v1806 = vmax.f32 %v1804, %v1805
        %v1807 = vrot.slane %v1806, 1
        %v1808 = vmax.f32 %v1806, %v1807
        %v1809 = vmax.f32 %v1758, %v1759
        %v1810 = vrot.slane %v1809, 4
        %v1811 = vmax.f32 %v1809, %v1810
        %v1812 = vrot.slane %v1811, 2
        %v1813 = vmax.f32 %v1811, %v1812
        %v1814 = vrot.slane %v1813, 1
        %v1815 = vmax.f32 %v1813, %v1814
        %v1816 = vadd.f32 %v1766, %v1024
        %v1817 = vadd.f32 %v1773, %v1024
        %v1818 = vadd.f32 %v1780, %v1024
        %v1819 = vadd.f32 %v1787, %v1024
        %v1820 = vadd.f32 %v1794, %v1024
        %v1821 = vadd.f32 %v1801, %v1024
        %v1822 = vadd.f32 %v1808, %v1024
        %v1823 = vadd.f32 %v1815, %v1024
        %v1824 = vtanh.pop %v1816
        %v1825 = vtanh.pop %v1817
        %v1826 = vtanh.pop %v1818
        %v1827 = vtanh.pop %v1819
        %v1828 = vtanh.pop %v1820
        %v1829 = vtanh.pop %v1821
        %v1830 = vtanh.pop %v1822
        %v1831 = vtanh.pop %v1823
        %v1832 = vld [vmem:[%s330] sm:$0xf]
        %v1833 = vld [vmem:[%s330 + $0x4] sm:$0x1]
        %v1834 = vld [vmem:[%s330 + $0x8] sm:$0xf]
        %v1835 = vld [vmem:[%s330 + $0xc] sm:$0x1]
        %v1836 = vld [vmem:[%s330 + $0x10] sm:$0xf]
        %v1837 = vld [vmem:[%s330 + $0x14] sm:$0x1]
        %v1838 = vld [vmem:[%s330 + $0x18] sm:$0xf]
        %v1839 = vld [vmem:[%s330 + $0x1c] sm:$0x1]
        %v1840 = vld [vmem:[%s330 + $0x20] sm:$0xf]
        %v1841 = vld [vmem:[%s330 + $0x24] sm:$0x1]
        %v1842 = vld [vmem:[%s330 + $0x28] sm:$0xf]
        %v1843 = vld [vmem:[%s330 + $0x2c] sm:$0x1]
        %v1844 = vld [vmem:[%s330 + $0x30] sm:$0xf]
        %v1845 = vld [vmem:[%s330 + $0x34] sm:$0x1]
        %v1846 = vld [vmem:[%s330 + $0x38] sm:$0xf]
        %v1847 = vld [vmem:[%s330 + $0x3c] sm:$0x1]
        %v1849 = vshrl.u32 %v1832, 16
        %v1851 = vrot.slane %v1849, 4
        %v1852 = vshll.u32 %v1832, 16
        %v1854 = vrot.slane %v1852, 5
        %v1855 = vor.u32 %v1851, %v1854
        %v1856 = vrot.slane %v1855, 4
        %v1858 = vshll.u32 %v1833, 16
        %v1860 = vrot.slane %v1858, 5
        %v1861 = vsel %vm368, %v1856, %v1860
        %v1863 = vshrl.u32 %v1834, 16
        %v1865 = vrot.slane %v1863, 4
        %v1866 = vshll.u32 %v1834, 16
        %v1868 = vrot.slane %v1866, 5
        %v1869 = vor.u32 %v1865, %v1868
        %v1870 = vrot.slane %v1869, 4
        %v1872 = vshll.u32 %v1835, 16
        %v1874 = vrot.slane %v1872, 5
        %v1875 = vsel %vm368, %v1870, %v1874
        %v1877 = vshrl.u32 %v1836, 16
        %v1879 = vrot.slane %v1877, 4
        %v1880 = vshll.u32 %v1836, 16
        %v1882 = vrot.slane %v1880, 5
        %v1883 = vor.u32 %v1879, %v1882
        %v1884 = vrot.slane %v1883, 4
        %v1886 = vshll.u32 %v1837, 16
        %v1888 = vrot.slane %v1886, 5
        %v1889 = vsel %vm368, %v1884, %v1888
        %v1891 = vshrl.u32 %v1838, 16
        %v1893 = vrot.slane %v1891, 4
        %v1894 = vshll.u32 %v1838, 16
        %v1896 = vrot.slane %v1894, 5
        %v1897 = vor.u32 %v1893, %v1896
        %v1898 = vrot.slane %v1897, 4
        %v1900 = vshll.u32 %v1839, 16
        %v1902 = vrot.slane %v1900, 5
        %v1903 = vsel %vm368, %v1898, %v1902
        %v1905 = vshrl.u32 %v1840, 16
        %v1907 = vrot.slane %v1905, 4
        %v1908 = vshll.u32 %v1840, 16
        %v1910 = vrot.slane %v1908, 5
        %v1911 = vor.u32 %v1907, %v1910
        %v1912 = vrot.slane %v1911, 4
        %v1914 = vshll.u32 %v1841, 16
        %v1916 = vrot.slane %v1914, 5
        %v1917 = vsel %vm368, %v1912, %v1916
        %v1919 = vshrl.u32 %v1842, 16
        %v1921 = vrot.slane %v1919, 4
        %v1922 = vshll.u32 %v1842, 16
        %v1924 = vrot.slane %v1922, 5
        %v1925 = vor.u32 %v1921, %v1924
        %v1926 = vrot.slane %v1925, 4
        %v1928 = vshll.u32 %v1843, 16
        %v1930 = vrot.slane %v1928, 5
        %v1931 = vsel %vm368, %v1926, %v1930
        %v1933 = vshrl.u32 %v1844, 16
        %v1935 = vrot.slane %v1933, 4
        %v1936 = vshll.u32 %v1844, 16
        %v1938 = vrot.slane %v1936, 5
        %v1939 = vor.u32 %v1935, %v1938
        %v1940 = vrot.slane %v1939, 4
        %v1942 = vshll.u32 %v1845, 16
        %v1944 = vrot.slane %v1942, 5
        %v1945 = vsel %vm368, %v1940, %v1944
        %v1947 = vshrl.u32 %v1846, 16
        %v1949 = vrot.slane %v1947, 4
        %v1950 = vshll.u32 %v1846, 16
        %v1952 = vrot.slane %v1950, 5
        %v1953 = vor.u32 %v1949, %v1952
        %v1954 = vrot.slane %v1953, 4
        %v1956 = vshll.u32 %v1847, 16
        %v1958 = vrot.slane %v1956, 5
        %v1959 = vsel %vm368, %v1954, %v1958
        %v1960 = vunpack.c.l.b16 %v1861
        %v1961 = vunpack.c.l.b16 %v1875
        %v1962 = vunpack.c.l.b16 %v1889
        %v1963 = vunpack.c.l.b16 %v1903
        %v1964 = vunpack.c.l.b16 %v1917
        %v1965 = vunpack.c.l.b16 %v1931
        %v1966 = vunpack.c.l.b16 %v1945
        %v1967 = vunpack.c.l.b16 %v1959
        %v1968 = vpack.c.b16 %v1961, %v1960
        %v1969 = vpack.c.b16 %v1963, %v1962
        %v1970 = vpack.c.b16 %v1965, %v1964
        %v1971 = vpack.c.b16 %v1967, %v1966
        %1976 = vmatprep.subr.bf16.mxu0 0
        %1977 = vmatpush1.bf16.msra.mxu0 %v546
        %1978 = vmatprep.subr.bf16.mxu0 0
        %1979 = vmatpush1.bf16.msra.mxu0 %v547
        %1980 = vmatprep.subr.bf16.mxu0 0
        %1981 = vmatpush1.bf16.msra.mxu0 %v548
        %1982 = vmatprep.subr.bf16.mxu0 0
        %1983 = vmatpush1.bf16.msra.mxu0 %v549
        %1984 = vmatprep.subr.bf16.mxu0 0
        %1985 = vmatpush1.bf16.msra.mxu0 %v550
        %1986 = vmatprep.subr.bf16.mxu0 0
        %1987 = vmatpush1.bf16.msra.mxu0 %v551
        %1988 = vmatprep.subr.bf16.mxu0 0
        %1989 = vmatpush1.bf16.msra.mxu0 %v552
        %1990 = vmatprep.subr.bf16.mxu0 0
        %1991 = vmatpush1.bf16.msra.mxu0 %v553
        %1992 = vmatprep.subr.bf16.mxu0 0
        %1993 = vmatpush1.bf16.msra.mxu0 0
        %1994 = vmatprep.subr.bf16.mxu0 0
        %1995 = vmatpush1.bf16.msra.mxu0 0
        %1996 = vmatprep.subr.bf16.mxu0 0
        %1997 = vmatpush1.bf16.msra.mxu0 0
        %1998 = vmatprep.subr.bf16.mxu0 0
        %1999 = vmatpush1.bf16.msra.mxu0 0
        %2000 = vmatprep.subr.bf16.mxu0 0
        %2001 = vmatpush1.bf16.msra.mxu0 0
        %2002 = vmatprep.subr.bf16.mxu0 0
        %2003 = vmatpush1.bf16.msra.mxu0 0
        %2004 = vmatprep.subr.bf16.mxu0 0
        %2005 = vmatpush1.bf16.msra.mxu0 0
        %2006 = vmatprep.subr.bf16.mxu0 0
        %2007 = vmatpush1.bf16.msra.mxu0 0
        %2008 = vmatprep.mubr.bf16.mxu0 0
        %2009 = vmatmul.mubr.bf16.gmra.mrb[0].mxu0 %v1968
        %v2010 = vpop.f32.mrb[0].mxu0
        %v2011 = vadd.f32 0.0, %v2010
        %v2012 = vpop.f32.mrb[0].mxu0
        %v2013 = vpop.f32.mrb[0].mxu0
        %v2014 = vadd.f32 0.0, %v2013
        %v2015 = vpop.f32.mrb[0].mxu0
        %2016 = vmatprep.mubr.bf16.mxu0 0
        %2017 = vmatmul.mubr.bf16.gmra.mrb[0].mxu0 %v1969
        %v2018 = vpop.f32.mrb[0].mxu0
        %v2019 = vadd.f32 0.0, %v2018
        %v2020 = vpop.f32.mrb[0].mxu0
        %v2021 = vpop.f32.mrb[0].mxu0
        %v2022 = vadd.f32 0.0, %v2021
        %v2023 = vpop.f32.mrb[0].mxu0
        %2024 = vmatprep.mubr.bf16.mxu0 0
        %2025 = vmatmul.mubr.bf16.gmra.mrb[0].mxu0 %v1970
        %v2026 = vpop.f32.mrb[0].mxu0
        %v2027 = vadd.f32 0.0, %v2026
        %v2028 = vpop.f32.mrb[0].mxu0
        %v2029 = vpop.f32.mrb[0].mxu0
        %v2030 = vadd.f32 0.0, %v2029
        %v2031 = vpop.f32.mrb[0].mxu0
        %2032 = vmatprep.mubr.bf16.mxu0 0
        %2033 = vmatmul.mubr.bf16.gmra.mrb[0].mxu0 %v1971
        %v2034 = vpop.f32.mrb[0].mxu0
        %v2035 = vadd.f32 0.0, %v2034
        %v2036 = vpop.f32.mrb[0].mxu0
        %v2037 = vpop.f32.mrb[0].mxu0
        %v2038 = vadd.f32 0.0, %v2037
        %v2039 = vpop.f32.mrb[0].mxu0
        %2040 = vdwg.mxu0
        %v2049 = vunpack.c.l.b16 %v1832
        %v2050 = vunpack.c.l.b16 %v1834
        %v2051 = vunpack.c.l.b16 %v1836
        %v2052 = vunpack.c.l.b16 %v1838
        %v2053 = vunpack.c.l.b16 %v1840
        %v2054 = vunpack.c.l.b16 %v1842
        %v2055 = vunpack.c.l.b16 %v1844
        %v2056 = vunpack.c.l.b16 %v1846
        %v2057 = vpack.c.b16 %v2050, %v2049
        %v2058 = vpack.c.b16 %v2052, %v2051
        %v2059 = vpack.c.b16 %v2054, %v2053
        %v2060 = vpack.c.b16 %v2056, %v2055
        %2065 = vmatprep.subr.bf16.mxu0 0
        %2066 = vmatpush1.bf16.msra.mxu0 %v683
        %2067 = vmatprep.subr.bf16.mxu0 0
        %2068 = vmatpush1.bf16.msra.mxu0 %v684
        %2069 = vmatprep.subr.bf16.mxu0 0
        %2070 = vmatpush1.bf16.msra.mxu0 %v685
        %2071 = vmatprep.subr.bf16.mxu0 0
        %2072 = vmatpush1.bf16.msra.mxu0 %v686
        %2073 = vmatprep.subr.bf16.mxu0 0
        %2074 = vmatpush1.bf16.msra.mxu0 %v687
        %2075 = vmatprep.subr.bf16.mxu0 0
        %2076 = vmatpush1.bf16.msra.mxu0 %v688
        %2077 = vmatprep.subr.bf16.mxu0 0
        %2078 = vmatpush1.bf16.msra.mxu0 %v689
        %2079 = vmatprep.subr.bf16.mxu0 0
        %2080 = vmatpush1.bf16.msra.mxu0 %v690
        %2081 = vmatprep.subr.bf16.mxu0 0
        %2082 = vmatpush1.bf16.msra.mxu0 0
        %2083 = vmatprep.subr.bf16.mxu0 0
        %2084 = vmatpush1.bf16.msra.mxu0 0
        %2085 = vmatprep.subr.bf16.mxu0 0
        %2086 = vmatpush1.bf16.msra.mxu0 0
        %2087 = vmatprep.subr.bf16.mxu0 0
        %2088 = vmatpush1.bf16.msra.mxu0 0
        %2089 = vmatprep.subr.bf16.mxu0 0
        %2090 = vmatpush1.bf16.msra.mxu0 0
        %2091 = vmatprep.subr.bf16.mxu0 0
        %2092 = vmatpush1.bf16.msra.mxu0 0
        %2093 = vmatprep.subr.bf16.mxu0 0
        %2094 = vmatpush1.bf16.msra.mxu0 0
        %2095 = vmatprep.subr.bf16.mxu0 0
        %2096 = vmatpush1.bf16.msra.mxu0 0
        %2097 = vmatprep.mubr.bf16.mxu0 0
        %2098 = vmatmul.mubr.bf16.gmra.mrb[0].mxu0 %v2057
        %v2099 = vpop.f32.mrb[0].mxu0
        %v2100 = vadd.f32 %v2011, %v2099
        %v2101 = vpop.f32.mrb[0].mxu0
        %v2102 = vpop.f32.mrb[0].mxu0
        %v2103 = vadd.f32 %v2014, %v2102
        %v2104 = vpop.f32.mrb[0].mxu0
        %2105 = vmatprep.mubr.bf16.mxu0 0
        %2106 = vmatmul.mubr.bf16.gmra.mrb[0].mxu0 %v2058
        %v2107 = vpop.f32.mrb[0].mxu0
        %v2108 = vadd.f32 %v2019, %v2107
        %v2109 = vpop.f32.mrb[0].mxu0
        %v2110 = vpop.f32.mrb[0].mxu0
        %v2111 = vadd.f32 %v2022, %v2110
        %v2112 = vpop.f32.mrb[0].mxu0
        %2113 = vmatprep.mubr.bf16.mxu0 0
        %2114 = vmatmul.mubr.bf16.gmra.mrb[0].mxu0 %v2059
        %v2115 = vpop.f32.mrb[0].mxu0
        %v2116 = vadd.f32 %v2027, %v2115
        %v2117 = vpop.f32.mrb[0].mxu0
        %v2118 = vpop.f32.mrb[0].mxu0
        %v2119 = vadd.f32 %v2030, %v2118
        %v2120 = vpop.f32.mrb[0].mxu0
        %2121 = vmatprep.mubr.bf16.mxu0 0
        %2122 = vmatmul.mubr.bf16.gmra.mrb[0].mxu0 %v2060
        %v2123 = vpop.f32.mrb[0].mxu0
        %v2124 = vadd.f32 %v2035, %v2123
        %v2125 = vpop.f32.mrb[0].mxu0
        %v2126 = vpop.f32.mrb[0].mxu0
        %v2127 = vadd.f32 %v2038, %v2126
        %v2128 = vpop.f32.mrb[0].mxu0
        %2129 = vdwg.mxu0
        %v2138 = vrot.slane %v1832, 5
        %v2139 = vrot.slane %v2138, 4
        %v2140 = vrot.slane %v1833, 5
        %v2141 = vsel %vm774, %v2139, %v2140
        %v2142 = vrot.slane %v1834, 5
        %v2143 = vrot.slane %v2142, 4
        %v2144 = vrot.slane %v1835, 5
        %v2145 = vsel %vm774, %v2143, %v2144
        %v2146 = vrot.slane %v1836, 5
        %v2147 = vrot.slane %v2146, 4
        %v2148 = vrot.slane %v1837, 5
        %v2149 = vsel %vm774, %v2147, %v2148
        %v2150 = vrot.slane %v1838, 5
        %v2151 = vrot.slane %v2150, 4
        %v2152 = vrot.slane %v1839, 5
        %v2153 = vsel %vm774, %v2151, %v2152
        %v2154 = vrot.slane %v1840, 5
        %v2155 = vrot.slane %v2154, 4
        %v2156 = vrot.slane %v1841, 5
        %v2157 = vsel %vm774, %v2155, %v2156
        %v2158 = vrot.slane %v1842, 5
        %v2159 = vrot.slane %v2158, 4
        %v2160 = vrot.slane %v1843, 5
        %v2161 = vsel %vm774, %v2159, %v2160
        %v2162 = vrot.slane %v1844, 5
        %v2163 = vrot.slane %v2162, 4
        %v2164 = vrot.slane %v1845, 5
        %v2165 = vsel %vm774, %v2163, %v2164
        %v2166 = vrot.slane %v1846, 5
        %v2167 = vrot.slane %v2166, 4
        %v2168 = vrot.slane %v1847, 5
        %v2169 = vsel %vm774, %v2167, %v2168
        %v2170 = vunpack.c.l.b16 %v2141
        %v2171 = vunpack.c.l.b16 %v2145
        %v2172 = vunpack.c.l.b16 %v2149
        %v2173 = vunpack.c.l.b16 %v2153
        %v2174 = vunpack.c.l.b16 %v2157
        %v2175 = vunpack.c.l.b16 %v2161
        %v2176 = vunpack.c.l.b16 %v2165
        %v2177 = vunpack.c.l.b16 %v2169
        %v2178 = vpack.c.b16 %v2171, %v2170
        %v2179 = vpack.c.b16 %v2173, %v2172
        %v2180 = vpack.c.b16 %v2175, %v2174
        %v2181 = vpack.c.b16 %v2177, %v2176
        %2186 = vmatprep.subr.bf16.mxu0 0
        %2187 = vmatpush1.bf16.msra.mxu0 %v872
        %2188 = vmatprep.subr.bf16.mxu0 0
        %2189 = vmatpush1.bf16.msra.mxu0 %v873
        %2190 = vmatprep.subr.bf16.mxu0 0
        %2191 = vmatpush1.bf16.msra.mxu0 %v874
        %2192 = vmatprep.subr.bf16.mxu0 0
        %2193 = vmatpush1.bf16.msra.mxu0 %v875
        %2194 = vmatprep.subr.bf16.mxu0 0
        %2195 = vmatpush1.bf16.msra.mxu0 %v876
        %2196 = vmatprep.subr.bf16.mxu0 0
        %2197 = vmatpush1.bf16.msra.mxu0 %v877
        %2198 = vmatprep.subr.bf16.mxu0 0
        %2199 = vmatpush1.bf16.msra.mxu0 %v878
        %2200 = vmatprep.subr.bf16.mxu0 0
        %2201 = vmatpush1.bf16.msra.mxu0 %v879
        %2202 = vmatprep.subr.bf16.mxu0 0
        %2203 = vmatpush1.bf16.msra.mxu0 0
        %2204 = vmatprep.subr.bf16.mxu0 0
        %2205 = vmatpush1.bf16.msra.mxu0 0
        %2206 = vmatprep.subr.bf16.mxu0 0
        %2207 = vmatpush1.bf16.msra.mxu0 0
        %2208 = vmatprep.subr.bf16.mxu0 0
        %2209 = vmatpush1.bf16.msra.mxu0 0
        %2210 = vmatprep.subr.bf16.mxu0 0
        %2211 = vmatpush1.bf16.msra.mxu0 0
        %2212 = vmatprep.subr.bf16.mxu0 0
        %2213 = vmatpush1.bf16.msra.mxu0 0
        %2214 = vmatprep.subr.bf16.mxu0 0
        %2215 = vmatpush1.bf16.msra.mxu0 0
        %2216 = vmatprep.subr.bf16.mxu0 0
        %2217 = vmatpush1.bf16.msra.mxu0 0
        %2218 = vmatprep.mubr.bf16.mxu0 0
        %2219 = vmatmul.mubr.bf16.gmra.mrb[0].mxu0 %v2178
        %v2220 = vpop.f32.mrb[0].mxu0
        %v2221 = vadd.f32 0.0, %v2220
        %v2222 = vpop.f32.mrb[0].mxu0
        %v2223 = vpop.f32.mrb[0].mxu0
        %v2224 = vadd.f32 0.0, %v2223
        %v2225 = vpop.f32.mrb[0].mxu0
        %2226 = vmatprep.mubr.bf16.mxu0 0
        %2227 = vmatmul.mubr.bf16.gmra.mrb[0].mxu0 %v2179
        %v2228 = vpop.f32.mrb[0].mxu0
        %v2229 = vadd.f32 0.0, %v2228
        %v2230 = vpop.f32.mrb[0].mxu0
        %v2231 = vpop.f32.mrb[0].mxu0
        %v2232 = vadd.f32 0.0, %v2231
        %v2233 = vpop.f32.mrb[0].mxu0
        %2234 = vmatprep.mubr.bf16.mxu0 0
        %2235 = vmatmul.mubr.bf16.gmra.mrb[0].mxu0 %v2180
        %v2236 = vpop.f32.mrb[0].mxu0
        %v2237 = vadd.f32 0.0, %v2236
        %v2238 = vpop.f32.mrb[0].mxu0
        %v2239 = vpop.f32.mrb[0].mxu0
        %v2240 = vadd.f32 0.0, %v2239
        %v2241 = vpop.f32.mrb[0].mxu0
        %2242 = vmatprep.mubr.bf16.mxu0 0
        %2243 = vmatmul.mubr.bf16.gmra.mrb[0].mxu0 %v2181
        %v2244 = vpop.f32.mrb[0].mxu0
        %v2245 = vadd.f32 0.0, %v2244
        %v2246 = vpop.f32.mrb[0].mxu0
        %v2247 = vpop.f32.mrb[0].mxu0
        %v2248 = vadd.f32 0.0, %v2247
        %v2249 = vpop.f32.mrb[0].mxu0
        %2250 = vdwg.mxu0
        %v2251 = vadd.f32 %v2100, %v2221
        %v2252 = vadd.f32 %v2103, %v2224
        %v2253 = vadd.f32 %v2108, %v2229
        %v2254 = vadd.f32 %v2111, %v2232
        %v2255 = vadd.f32 %v2116, %v2237
        %v2256 = vadd.f32 %v2119, %v2240
        %v2257 = vadd.f32 %v2124, %v2245
        %v2258 = vadd.f32 %v2127, %v2248
        %vm2259 = vcmp.lt.s32.totalorder %v962, 7
        %v2260 = vsel %vm2259, %v2251, -inf
        %v2261 = vsel %vm2259, %v2252, -inf
        %v2262 = vsel %vm2259, %v2253, -inf
        %v2263 = vsel %vm2259, %v2254, -inf
        %v2264 = vsel %vm2259, %v2255, -inf
        %v2265 = vsel %vm2259, %v2256, -inf
        %v2266 = vsel %vm2259, %v2257, -inf
        %v2267 = vsel %vm2259, %v2258, -inf
        %v2268 = vrot.slane %v2260, 4
        %v2269 = vmax.f32 %v2260, %v2268
        %v2270 = vrot.slane %v2269, 2
        %v2271 = vmax.f32 %v2269, %v2270
        %v2272 = vrot.slane %v2271, 1
        %v2273 = vmax.f32 %v2271, %v2272
        %v2274 = vrot.slane %v2261, 4
        %v2275 = vmax.f32 %v2261, %v2274
        %v2276 = vrot.slane %v2275, 2
        %v2277 = vmax.f32 %v2275, %v2276
        %v2278 = vrot.slane %v2277, 1
        %v2279 = vmax.f32 %v2277, %v2278
        %v2280 = vrot.slane %v2262, 4
        %v2281 = vmax.f32 %v2262, %v2280
        %v2282 = vrot.slane %v2281, 2
        %v2283 = vmax.f32 %v2281, %v2282
        %v2284 = vrot.slane %v2283, 1
        %v2285 = vmax.f32 %v2283, %v2284
        %v2286 = vrot.slane %v2263, 4
        %v2287 = vmax.f32 %v2263, %v2286
        %v2288 = vrot.slane %v2287, 2
        %v2289 = vmax.f32 %v2287, %v2288
        %v2290 = vrot.slane %v2289, 1
        %v2291 = vmax.f32 %v2289, %v2290
        %v2292 = vrot.slane %v2264, 4
        %v2293 = vmax.f32 %v2264, %v2292
        %v2294 = vrot.slane %v2293, 2
        %v2295 = vmax.f32 %v2293, %v2294
        %v2296 = vrot.slane %v2295, 1
        %v2297 = vmax.f32 %v2295, %v2296
        %v2298 = vrot.slane %v2265, 4
        %v2299 = vmax.f32 %v2265, %v2298
        %v2300 = vrot.slane %v2299, 2
        %v2301 = vmax.f32 %v2299, %v2300
        %v2302 = vrot.slane %v2301, 1
        %v2303 = vmax.f32 %v2301, %v2302
        %v2304 = vrot.slane %v2266, 4
        %v2305 = vmax.f32 %v2266, %v2304
        %v2306 = vrot.slane %v2305, 2
        %v2307 = vmax.f32 %v2305, %v2306
        %v2308 = vrot.slane %v2307, 1
        %v2309 = vmax.f32 %v2307, %v2308
        %v2310 = vrot.slane %v2267, 4
        %v2311 = vmax.f32 %v2267, %v2310
        %v2312 = vrot.slane %v2311, 2
        %v2313 = vmax.f32 %v2311, %v2312
        %v2314 = vrot.slane %v2313, 1
        %v2315 = vmax.f32 %v2313, %v2314
        %v2316 = vadd.f32 %v2273, %v1024
        %v2317 = vadd.f32 %v2279, %v1024
        %v2318 = vadd.f32 %v2285, %v1024
        %v2319 = vadd.f32 %v2291, %v1024
        %v2320 = vadd.f32 %v2297, %v1024
        %v2321 = vadd.f32 %v2303, %v1024
        %v2322 = vadd.f32 %v2309, %v1024
        %v2323 = vadd.f32 %v2315, %v1024
        %v2324 = vtanh.pop %v2316
        %v2325 = vtanh.pop %v2317
        %v2326 = vtanh.pop %v2318
        %v2327 = vtanh.pop %v2319
        %v2328 = vtanh.pop %v2320
        %v2329 = vtanh.pop %v2321
        %v2330 = vtanh.pop %v2322
        %v2331 = vtanh.pop %v2323
        %v2332 = vpack.c.bf16 %v1034, %v1034
        %v2333 = vpack.c.bf16 %v1035, %v1035
        %v2334 = vpack.c.bf16 %v1036, %v1036
        %v2335 = vpack.c.bf16 %v1037, %v1037
        %v2336 = vpack.c.bf16 %v1038, %v1038
        %v2337 = vpack.c.bf16 %v1039, %v1039
        %v2338 = vpack.c.bf16 %v1040, %v1040
        %v2339 = vpack.c.bf16 %v1041, %v1041
        %v2340 = vld [vmem:[%s5] sm:$0xf]
        %v2341 = vld [vmem:[%s5 + $0x4] sm:$0xf]
        %v2342 = vld [vmem:[%s5 + $0x8] sm:$0xf]
        %v2343 = vld [vmem:[%s5 + $0xc] sm:$0xf]
        %v2344 = vld [vmem:[%s5 + $0x10] sm:$0xf]
        %v2345 = vld [vmem:[%s5 + $0x14] sm:$0xf]
        %v2346 = vld [vmem:[%s5 + $0x18] sm:$0xf]
        %v2347 = vld [vmem:[%s5 + $0x1c] sm:$0xf]
        %v2348 = vld [vmem:[%s5 + $0x20] sm:$0xf]
        %v2349 = vld [vmem:[%s5 + $0x24] sm:$0xf]
        %v2350 = vld [vmem:[%s5 + $0x28] sm:$0xf]
        %v2351 = vld [vmem:[%s5 + $0x2c] sm:$0xf]
        %v2352 = vld [vmem:[%s5 + $0x30] sm:$0xf]
        %v2353 = vld [vmem:[%s5 + $0x34] sm:$0xf]
        %v2354 = vld [vmem:[%s5 + $0x38] sm:$0xf]
        %v2355 = vld [vmem:[%s5 + $0x3c] sm:$0xf]
        %v2356 = vpack.c.bf16 %v1824, %v1824
        %v2357 = vpack.c.bf16 %v1825, %v1825
        %v2358 = vpack.c.bf16 %v1826, %v1826
        %v2359 = vpack.c.bf16 %v1827, %v1827
        %v2360 = vpack.c.bf16 %v1828, %v1828
        %v2361 = vpack.c.bf16 %v1829, %v1829
        %v2362 = vpack.c.bf16 %v1830, %v1830
        %v2363 = vpack.c.bf16 %v1831, %v1831
        %s2364 = scalar_lea.vmem %s5, 64
        %v2365 = vld [vmem:[%s2364] sm:$0xf]
        %v2366 = vld [vmem:[%s2364 + $0x4] sm:$0xf]
        %v2367 = vld [vmem:[%s2364 + $0x8] sm:$0xf]
        %v2368 = vld [vmem:[%s2364 + $0xc] sm:$0xf]
        %v2369 = vld [vmem:[%s2364 + $0x10] sm:$0xf]
        %v2370 = vld [vmem:[%s2364 + $0x14] sm:$0xf]
        %v2371 = vld [vmem:[%s2364 + $0x18] sm:$0xf]
        %v2372 = vld [vmem:[%s2364 + $0x1c] sm:$0xf]
        %v2373 = vld [vmem:[%s2364 + $0x20] sm:$0xf]
        %v2374 = vld [vmem:[%s2364 + $0x24] sm:$0xf]
        %v2375 = vld [vmem:[%s2364 + $0x28] sm:$0xf]
        %v2376 = vld [vmem:[%s2364 + $0x2c] sm:$0xf]
        %v2377 = vld [vmem:[%s2364 + $0x30] sm:$0xf]
        %v2378 = vld [vmem:[%s2364 + $0x34] sm:$0xf]
        %v2379 = vld [vmem:[%s2364 + $0x38] sm:$0xf]
        %v2380 = vld [vmem:[%s2364 + $0x3c] sm:$0xf]
        %v2389 = vunpack.c.l.b16 %v2356
        %v2390 = vunpack.c.l.b16 %v2357
        %v2391 = vunpack.c.l.b16 %v2358
        %v2392 = vunpack.c.l.b16 %v2359
        %v2393 = vunpack.c.l.b16 %v2360
        %v2394 = vunpack.c.l.b16 %v2361
        %v2395 = vunpack.c.l.b16 %v2362
        %v2396 = vunpack.c.l.b16 %v2363
        %v2397 = vrot.slane %v2390, 7
        %vm2398 = vcmask 1041409
        %v2399 = vsel %vm2398, %v2397, %v2389
        %v2400 = vrot.slane %v2391, 6
        %vm2401 = vcmask 1042434
        %v2402 = vsel %vm2401, %v2400, %v2399
        %v2403 = vrot.slane %v2392, 5
        %vm2404 = vcmask 1043459
        %v2405 = vsel %vm2404, %v2403, %v2402
        %v2406 = vrot.slane %v2393, 4
        %vm2407 = vcmask 1044484
        %v2408 = vsel %vm2407, %v2406, %v2405
        %v2409 = vrot.slane %v2394, 3
        %vm2410 = vcmask 1045509
        %v2411 = vsel %vm2410, %v2409, %v2408
        %v2412 = vrot.slane %v2395, 2
        %vm2413 = vcmask 1046534
        %v2414 = vsel %vm2413, %v2412, %v2411
        %v2415 = vrot.slane %v2396, 1
        %vm2416 = vcmask 1047559
        %v2417 = vsel %vm2416, %v2415, %v2414
        %v2418 = vpack.c.b16 %v2417, %v2417
        %v2436 = vunpack.c.l.b16 %v2365
        %v2437 = vunpack.c.l.b16 %v2366
        %v2438 = vunpack.c.l.b16 %v2367
        %v2439 = vunpack.c.l.b16 %v2368
        %v2440 = vunpack.c.l.b16 %v2369
        %v2441 = vunpack.c.l.b16 %v2370
        %v2442 = vunpack.c.l.b16 %v2371
        %v2443 = vunpack.c.l.b16 %v2372
        %v2444 = vunpack.c.l.b16 %v2373
        %v2445 = vunpack.c.l.b16 %v2374
        %v2446 = vunpack.c.l.b16 %v2375
        %v2447 = vunpack.c.l.b16 %v2376
        %v2448 = vunpack.c.l.b16 %v2377
        %v2449 = vunpack.c.l.b16 %v2378
        %v2450 = vunpack.c.l.b16 %v2379
        %v2451 = vunpack.c.l.b16 %v2380
        %v2452 = vpack.c.b16 %v2437, %v2436
        %v2453 = vpack.c.b16 %v2439, %v2438
        %v2454 = vpack.c.b16 %v2441, %v2440
        %v2455 = vpack.c.b16 %v2443, %v2442
        %v2456 = vpack.c.b16 %v2445, %v2444
        %v2457 = vpack.c.b16 %v2447, %v2446
        %v2458 = vpack.c.b16 %v2449, %v2448
        %v2459 = vpack.c.b16 %v2451, %v2450
        %2468 = vmatprep.subr.bf16.mxu0 0
        %2469 = vmatpush1.bf16.msra.mxu0 %v2452
        %2470 = vmatprep.subr.bf16.mxu0 0
        %2471 = vmatpush1.bf16.msra.mxu0 %v2453
        %2472 = vmatprep.subr.bf16.mxu0 0
        %2473 = vmatpush1.bf16.msra.mxu0 %v2454
        %2474 = vmatprep.subr.bf16.mxu0 0
        %2475 = vmatpush1.bf16.msra.mxu0 %v2455
        %2476 = vmatprep.subr.bf16.mxu0 0
        %2477 = vmatpush1.bf16.msra.mxu0 %v2456
        %2478 = vmatprep.subr.bf16.mxu0 0
        %2479 = vmatpush1.bf16.msra.mxu0 %v2457
        %2480 = vmatprep.subr.bf16.mxu0 0
        %2481 = vmatpush1.bf16.msra.mxu0 %v2458
        %2482 = vmatprep.subr.bf16.mxu0 0
        %2483 = vmatpush1.bf16.msra.mxu0 %v2459
        %2484 = vmatprep.subr.bf16.mxu0 0
        %2485 = vmatpush1.bf16.msra.mxu0 0
        %2486 = vmatprep.subr.bf16.mxu0 0
        %2487 = vmatpush1.bf16.msra.mxu0 0
        %2488 = vmatprep.subr.bf16.mxu0 0
        %2489 = vmatpush1.bf16.msra.mxu0 0
        %2490 = vmatprep.subr.bf16.mxu0 0
        %2491 = vmatpush1.bf16.msra.mxu0 0
        %2492 = vmatprep.subr.bf16.mxu0 0
        %2493 = vmatpush1.bf16.msra.mxu0 0
        %2494 = vmatprep.subr.bf16.mxu0 0
        %2495 = vmatpush1.bf16.msra.mxu0 0
        %2496 = vmatprep.subr.bf16.mxu0 0
        %2497 = vmatpush1.bf16.msra.mxu0 0
        %2498 = vmatprep.subr.bf16.mxu0 0
        %2499 = vmatpush1.bf16.msra.mxu0 0
        %2500 = vmatprep.mubr.bf16.mxu0 0
        %2501 = vmatmul.mubr.bf16.gmra.mrb[0].mxu0 %v2418
        %v2502 = vpop.f32.mrb[0].mxu0
        %v2503 = vadd.f32 0.0, %v2502
        %v2504 = vpop.f32.mrb[0].mxu0
        %v2505 = vpop.f32.mrb[0].mxu0
        %v2506 = vpop.f32.mrb[0].mxu0
        %2507 = vdwg.mxu0
        %v2516 = vunpack.c.l.b16 %v2332
        %v2517 = vunpack.c.l.b16 %v2333
        %v2518 = vunpack.c.l.b16 %v2334
        %v2519 = vunpack.c.l.b16 %v2335
        %v2520 = vunpack.c.l.b16 %v2336
        %v2521 = vunpack.c.l.b16 %v2337
        %v2522 = vunpack.c.l.b16 %v2338
        %v2523 = vunpack.c.l.b16 %v2339
        %v2524 = vrot.slane %v2517, 7
        %v2525 = vsel %vm2398, %v2524, %v2516
        %v2526 = vrot.slane %v2518, 6
        %v2527 = vsel %vm2401, %v2526, %v2525
        %v2528 = vrot.slane %v2519, 5
        %v2529 = vsel %vm2404, %v2528, %v2527
        %v2530 = vrot.slane %v2520, 4
        %v2531 = vsel %vm2407, %v2530, %v2529
        %v2532 = vrot.slane %v2521, 3
        %v2533 = vsel %vm2410, %v2532, %v2531
        %v2534 = vrot.slane %v2522, 2
        %v2535 = vsel %vm2413, %v2534, %v2533
        %v2536 = vrot.slane %v2523, 1
        %v2537 = vsel %vm2416, %v2536, %v2535
        %v2538 = vpack.c.b16 %v2537, %v2537
        %v2556 = vunpack.c.l.b16 %v2340
        %v2557 = vunpack.c.l.b16 %v2341
        %v2558 = vunpack.c.l.b16 %v2342
        %v2559 = vunpack.c.l.b16 %v2343
        %v2560 = vunpack.c.l.b16 %v2344
        %v2561 = vunpack.c.l.b16 %v2345
        %v2562 = vunpack.c.l.b16 %v2346
        %v2563 = vunpack.c.l.b16 %v2347
        %v2564 = vunpack.c.l.b16 %v2348
        %v2565 = vunpack.c.l.b16 %v2349
        %v2566 = vunpack.c.l.b16 %v2350
        %v2567 = vunpack.c.l.b16 %v2351
        %v2568 = vunpack.c.l.b16 %v2352
        %v2569 = vunpack.c.l.b16 %v2353
        %v2570 = vunpack.c.l.b16 %v2354
        %v2571 = vunpack.c.l.b16 %v2355
        %v2572 = vpack.c.b16 %v2557, %v2556
        %v2573 = vpack.c.b16 %v2559, %v2558
        %v2574 = vpack.c.b16 %v2561, %v2560
        %v2575 = vpack.c.b16 %v2563, %v2562
        %v2576 = vpack.c.b16 %v2565, %v2564
        %v2577 = vpack.c.b16 %v2567, %v2566
        %v2578 = vpack.c.b16 %v2569, %v2568
        %v2579 = vpack.c.b16 %v2571, %v2570
        %2588 = vmatprep.subr.bf16.mxu0 0
        %2589 = vmatpush1.bf16.msra.mxu0 %v2572
        %2590 = vmatprep.subr.bf16.mxu0 0
        %2591 = vmatpush1.bf16.msra.mxu0 %v2573
        %2592 = vmatprep.subr.bf16.mxu0 0
        %2593 = vmatpush1.bf16.msra.mxu0 %v2574
        %2594 = vmatprep.subr.bf16.mxu0 0
        %2595 = vmatpush1.bf16.msra.mxu0 %v2575
        %2596 = vmatprep.subr.bf16.mxu0 0
        %2597 = vmatpush1.bf16.msra.mxu0 %v2576
        %2598 = vmatprep.subr.bf16.mxu0 0
        %2599 = vmatpush1.bf16.msra.mxu0 %v2577
        %2600 = vmatprep.subr.bf16.mxu0 0
        %2601 = vmatpush1.bf16.msra.mxu0 %v2578
        %2602 = vmatprep.subr.bf16.mxu0 0
        %2603 = vmatpush1.bf16.msra.mxu0 %v2579
        %2604 = vmatprep.subr.bf16.mxu0 0
        %2605 = vmatpush1.bf16.msra.mxu0 0
        %2606 = vmatprep.subr.bf16.mxu0 0
        %2607 = vmatpush1.bf16.msra.mxu0 0
        %2608 = vmatprep.subr.bf16.mxu0 0
        %2609 = vmatpush1.bf16.msra.mxu0 0
        %2610 = vmatprep.subr.bf16.mxu0 0
        %2611 = vmatpush1.bf16.msra.mxu0 0
        %2612 = vmatprep.subr.bf16.mxu0 0
        %2613 = vmatpush1.bf16.msra.mxu0 0
        %2614 = vmatprep.subr.bf16.mxu0 0
        %2615 = vmatpush1.bf16.msra.mxu0 0
        %2616 = vmatprep.subr.bf16.mxu0 0
        %2617 = vmatpush1.bf16.msra.mxu0 0
        %2618 = vmatprep.subr.bf16.mxu0 0
        %2619 = vmatpush1.bf16.msra.mxu0 0
        %2620 = vmatprep.mubr.bf16.mxu0 0
        %2621 = vmatmul.mubr.bf16.gmra.mrb[0].mxu0 %v2538
        %v2622 = vpop.f32.mrb[0].mxu0
        %v2623 = vadd.f32 %v2503, %v2622
        %v2624 = vpop.f32.mrb[0].mxu0
        %v2625 = vpop.f32.mrb[0].mxu0
        %v2626 = vpop.f32.mrb[0].mxu0
        %2627 = vdwg.mxu0
        %v2628 = vpack.c.bf16 %v2324, %v2324
        %v2629 = vpack.c.bf16 %v2325, %v2325
        %v2630 = vpack.c.bf16 %v2326, %v2326
        %v2631 = vpack.c.bf16 %v2327, %v2327
        %v2632 = vpack.c.bf16 %v2328, %v2328
        %v2633 = vpack.c.bf16 %v2329, %v2329
        %v2634 = vpack.c.bf16 %v2330, %v2330
        %v2635 = vpack.c.bf16 %v2331, %v2331
        %s2636 = scalar_lea.vmem %s5, 128
        %v2637 = vld [vmem:[%s2636] sm:$0xf]
        %v2638 = vld [vmem:[%s2636 + $0x4] sm:$0xf]
        %v2639 = vld [vmem:[%s2636 + $0x8] sm:$0xf]
        %v2640 = vld [vmem:[%s2636 + $0xc] sm:$0xf]
        %v2641 = vld [vmem:[%s2636 + $0x10] sm:$0xf]
        %v2642 = vld [vmem:[%s2636 + $0x14] sm:$0xf]
        %v2643 = vld [vmem:[%s2636 + $0x18] sm:$0xf]
        %v2644 = vld [vmem:[%s2636 + $0x1c] sm:$0xf]
        %v2645 = vld [vmem:[%s2636 + $0x20] sm:$0xf]
        %v2646 = vld [vmem:[%s2636 + $0x24] sm:$0xf]
        %v2647 = vld [vmem:[%s2636 + $0x28] sm:$0xf]
        %v2648 = vld [vmem:[%s2636 + $0x2c] sm:$0xf]
        %v2649 = vld [vmem:[%s2636 + $0x30] sm:$0xf]
        %v2650 = vld [vmem:[%s2636 + $0x34] sm:$0xf]
        %v2651 = vld [vmem:[%s2636 + $0x38] sm:$0xf]
        %v2652 = vld [vmem:[%s2636 + $0x3c] sm:$0xf]
        %v2661 = vunpack.c.l.b16 %v2628
        %v2662 = vunpack.c.l.b16 %v2629
        %v2663 = vunpack.c.l.b16 %v2630
        %v2664 = vunpack.c.l.b16 %v2631
        %v2665 = vunpack.c.l.b16 %v2632
        %v2666 = vunpack.c.l.b16 %v2633
        %v2667 = vunpack.c.l.b16 %v2634
        %v2668 = vunpack.c.l.b16 %v2635
        %v2669 = vrot.slane %v2662, 7
        %v2670 = vsel %vm2398, %v2669, %v2661
        %v2671 = vrot.slane %v2663, 6
        %v2672 = vsel %vm2401, %v2671, %v2670
        %v2673 = vrot.slane %v2664, 5
        %v2674 = vsel %vm2404, %v2673, %v2672
        %v2675 = vrot.slane %v2665, 4
        %v2676 = vsel %vm2407, %v2675, %v2674
        %v2677 = vrot.slane %v2666, 3
        %v2678 = vsel %vm2410, %v2677, %v2676
        %v2679 = vrot.slane %v2667, 2
        %v2680 = vsel %vm2413, %v2679, %v2678
        %v2681 = vrot.slane %v2668, 1
        %v2682 = vsel %vm2416, %v2681, %v2680
        %v2683 = vpack.c.b16 %v2682, %v2682
        %v2701 = vunpack.c.l.b16 %v2637
        %v2702 = vunpack.c.l.b16 %v2638
        %v2703 = vunpack.c.l.b16 %v2639
        %v2704 = vunpack.c.l.b16 %v2640
        %v2705 = vunpack.c.l.b16 %v2641
        %v2706 = vunpack.c.l.b16 %v2642
        %v2707 = vunpack.c.l.b16 %v2643
        %v2708 = vunpack.c.l.b16 %v2644
        %v2709 = vunpack.c.l.b16 %v2645
        %v2710 = vunpack.c.l.b16 %v2646
        %v2711 = vunpack.c.l.b16 %v2647
        %v2712 = vunpack.c.l.b16 %v2648
        %v2713 = vunpack.c.l.b16 %v2649
        %v2714 = vunpack.c.l.b16 %v2650
        %v2715 = vunpack.c.l.b16 %v2651
        %v2716 = vunpack.c.l.b16 %v2652
        %v2717 = vpack.c.b16 %v2702, %v2701
        %v2718 = vpack.c.b16 %v2704, %v2703
        %v2719 = vpack.c.b16 %v2706, %v2705
        %v2720 = vpack.c.b16 %v2708, %v2707
        %v2721 = vpack.c.b16 %v2710, %v2709
        %v2722 = vpack.c.b16 %v2712, %v2711
        %v2723 = vpack.c.b16 %v2714, %v2713
        %v2724 = vpack.c.b16 %v2716, %v2715
        %2733 = vmatprep.subr.bf16.mxu0 0
        %2734 = vmatpush1.bf16.msra.mxu0 %v2717
        %2735 = vmatprep.subr.bf16.mxu0 0
        %2736 = vmatpush1.bf16.msra.mxu0 %v2718
        %2737 = vmatprep.subr.bf16.mxu0 0
        %2738 = vmatpush1.bf16.msra.mxu0 %v2719
        %2739 = vmatprep.subr.bf16.mxu0 0
        %2740 = vmatpush1.bf16.msra.mxu0 %v2720
        %2741 = vmatprep.subr.bf16.mxu0 0
        %2742 = vmatpush1.bf16.msra.mxu0 %v2721
        %2743 = vmatprep.subr.bf16.mxu0 0
        %2744 = vmatpush1.bf16.msra.mxu0 %v2722
        %2745 = vmatprep.subr.bf16.mxu0 0
        %2746 = vmatpush1.bf16.msra.mxu0 %v2723
        %2747 = vmatprep.subr.bf16.mxu0 0
        %2748 = vmatpush1.bf16.msra.mxu0 %v2724
        %2749 = vmatprep.subr.bf16.mxu0 0
        %2750 = vmatpush1.bf16.msra.mxu0 0
        %2751 = vmatprep.subr.bf16.mxu0 0
        %2752 = vmatpush1.bf16.msra.mxu0 0
        %2753 = vmatprep.subr.bf16.mxu0 0
        %2754 = vmatpush1.bf16.msra.mxu0 0
        %2755 = vmatprep.subr.bf16.mxu0 0
        %2756 = vmatpush1.bf16.msra.mxu0 0
        %2757 = vmatprep.subr.bf16.mxu0 0
        %2758 = vmatpush1.bf16.msra.mxu0 0
        %2759 = vmatprep.subr.bf16.mxu0 0
        %2760 = vmatpush1.bf16.msra.mxu0 0
        %2761 = vmatprep.subr.bf16.mxu0 0
        %2762 = vmatpush1.bf16.msra.mxu0 0
        %2763 = vmatprep.subr.bf16.mxu0 0
        %2764 = vmatpush1.bf16.msra.mxu0 0
        %2765 = vmatprep.mubr.bf16.mxu0 0
        %2766 = vmatmul.mubr.bf16.gmra.mrb[0].mxu0 %v2683
        %v2767 = vpop.f32.mrb[0].mxu0
        %v2768 = vadd.f32 0.0, %v2767
        %v2769 = vpop.f32.mrb[0].mxu0
        %v2770 = vpop.f32.mrb[0].mxu0
        %v2771 = vpop.f32.mrb[0].mxu0
        %2772 = vdwg.mxu0
        %v2773 = vadd.f32 %v2623, %v2768
        %v2774 = vld [vmem:[%s6] sm:$0x1]
        %v2776 = vlaneseq
        %v2777 = vshrl.u32 %v2776, 7
        %v2778 = vsub.s32 0, %v2777
        %v2779 = vrot.slane %v2774, %v2778
        %v2781 = vadd.f32 %v2773, %v2779
        %2782 = vst [vmem:[%s310] sm:$0xff] %v2781
        %s2783 = sand.u32 %s191, 1
        %s2784 = scalar_lea.sflag [#allocation3], %s2783
        %s2785 = sand.u32 %s191, 1
        %s2786 = smul.addr %s2785, 8
        %s2787 = scalar_lea.vmem [#allocation2], %s2786
        // Predicated region
        $region49: #{tpu_custom_call.1} parent=47 // pred_check
          %p2788 = pneg %p201
        $region50: #{tpu_custom_call.1} parent=47 // pred_check_branch
          %2790 = sbr.rel (%p2788) target = $region52
        $region51: #{tpu_custom_call.1} parent=47 // pred_region
          %s2792 = ssub.s32 128, 128
          %2793 = vsyncadd %s2784, %s2792
          %s2794 = smul.addr %s21, 128
          %s2795 = scalar_lea.hbm %s7, %s2794
          %s2797 = sshll.u32 %s2787, 4
          %s2798 = int_to_ptr.vmem [resolvable:$true] %s2797
          %2800 = dma.vmem_to_hbm [thread:$0]  %s2798, 128, %s2795, %s2784
        $region52: #{tpu_custom_call.1} parent=47 // pred_fallthru
          _
      $region48: #{tpu_custom_call.1} parent=5 // pred_fallthru
        _
      %p2801 = scmp.le.s32.totalorder 2, %s16
      // Predicated region
      $region53: #{tpu_custom_call.1} parent=5 // pred_check
        %p2802 = pneg %p2801
      $region54: #{tpu_custom_call.1} parent=5 // pred_check_branch
        %2804 = sbr.rel (%p2802) target = $region56
      $region55: #{tpu_custom_call.1} parent=5 // pred_region
        %s2805 = ssub.s32 %s16, 2
        // Predicated region
        $region57: #{tpu_custom_call.1} parent=55 // pred_check
          %p2806 = pneg %p207
        $region58: #{tpu_custom_call.1} parent=55 // pred_check_branch
          %2808 = sbr.rel (%p2806) target = $region60
        $region59: #{tpu_custom_call.1} parent=55 // pred_region
          %s2809 = sand.u32 %s192, 1
          %s2810 = scalar_lea.sflag [#allocation3], %s2809
          %s2811 = sand.u32 %s192, 1
          %s2812 = smul.addr %s2811, 8
          %s2813 = scalar_lea.vmem [#allocation2], %s2812
          %2814 = dma.done %s2810, 128
        $region60: #{tpu_custom_call.1} parent=55 // pred_fallthru
          _
      $region56: #{tpu_custom_call.1} parent=5 // pred_fallthru
        _
    $region6: #{tpu_custom_call.1} parent=1 // loop_footer
      %s20 = sadd.s32 1, %s16
    $region7: #{tpu_custom_call.1} parent=1 // loop_footer_branch
      %15 = sbr.rel target = $region3
    $region8: #{tpu_custom_call.1} parent=1 // loop_exit
      _
    %2815 = vsyncpa [#allocation3], 1
    %s2816 = scalar_lea.sflag [#allocation3], 1
    %2817 = vsyncpa %s2816, 1

</llo_original>
